<compile_context>
chip_gen: v7x
topology: tpu7x:2x2x1
jax: 0.10.0
libtpu: 0.0.40
codegen_flags: <defaults>
</compile_context>

<pallas_src>
import jax
import jax.numpy as jnp
from jax import lax
from jax.experimental import pallas as pl
from jax.experimental.pallas import tpu as pltpu


# ---------------------------------------------------------------------------
# Fused kernel: (backbone final stage + global mean) x 2 streams + DAIN head
# ---------------------------------------------------------------------------
def dain_kernel(img_ref, diff_ref, w1_ref, b1_ref, w2_ref, b2_ref,
                wfc_ref, bfc_ref, o_ref, imgf_sc, difff_sc):
    """Fused DAIN forward.

    img_ref/diff_ref : (N, Cin, P)  NCHW with spatial flattened (no wrapper
                                    transpose); channels sit on sublanes.
    w1/w2            : (Cin, CF)    lane-dense pointwise-conv weights
    b1/b2            : (1, CF)
    wfc              : (NCLASS, 2*CF)  PyTorch nn.Linear layout (lane-dense)
    bfc              : (1, NCLASS)
    o_ref            : (N, NCLASS)
    imgf_sc/difff_sc : (N, CF) f32 VMEM scratch holding the pooled features.
    """
    n_batch = img_ref.shape[0]
    cf = w1_ref.shape[1]

    w1 = w1_ref[...]
    b1 = b1_ref[...]
    w2 = w2_ref[...]
    b2 = b2_ref[...]

    # Stand-in backbone stage (1x1 conv + ReLU6) fused with the global spatial
    # mean, for both streams.  The contraction runs over the channel dim
    # (dim 0 of the per-sample (Cin, P) tile), so the NCHW input needs no
    # transpose anywhere.
    dn_xw = (((0,), (0,)), ((), ()))          # x^T @ w  -> (P, CF)
    for n in range(n_batch):                  # static unroll; N is tiny
        y = lax.dot_general(img_ref[n], w1, dn_xw,
                            preferred_element_type=jnp.float32)
        y = jnp.clip(y + b1, 0.0, 6.0)                            # ReLU6
        imgf_sc[pl.ds(n, 1), :] = jnp.mean(y, axis=0, keepdims=True)

        y = lax.dot_general(diff_ref[n], w2, dn_xw,
                            preferred_element_type=jnp.float32)
        y = jnp.clip(y + b2, 0.0, 6.0)
        difff_sc[pl.ds(n, 1), :] = jnp.mean(y, axis=0, keepdims=True)

    # DAIN head: diff_f += img_f ; out = cat([img_f, diff_f], 1) @ Wfc^T + bfc
    # Wfc stays in its (nclass, 2*CF) PyTorch layout -> contract on its last
    # dim (A @ B^T); the concat becomes two partial matmuls on the split weight.
    img_f = imgf_sc[...]                      # (N, CF)
    diff_f = difff_sc[...] + img_f            # residual add
    wfc = wfc_ref[...]
    dn_bt = (((1,), (1,)), ((), ()))          # a @ b^T
    out = lax.dot_general(img_f, wfc[:, :cf], dn_bt,
                          preferred_element_type=jnp.float32)
    out = out + lax.dot_general(diff_f, wfc[:, cf:], dn_bt,
                                preferred_element_type=jnp.float32)
    o_ref[...] = out + bfc_ref[...]


# ---------------------------------------------------------------------------
# Full DAIN forward: single pallas_call, no wrapper transposes
# ---------------------------------------------------------------------------
def dain_forward(img_nchw, diff_nchw, params):
    N, Cin, H, W = img_nchw.shape
    P = H * W
    CF = params["w1"].shape[1]
    NCLASS = params["w_fc"].shape[0]

    # NCHW -> (N, Cin, H*W): contiguous (metadata-only) reshape; NO transpose.
    img = img_nchw.reshape(N, Cin, P)
    diff = diff_nchw.reshape(N, Cin, P)
    b1 = params["b1"].reshape(1, CF)
    b2 = params["b2"].reshape(1, CF)
    bfc = params["b_fc"].reshape(1, NCLASS)

    # All operands fit VMEM many times over at these sizes; at realistic
    # spatial sizes, tile P on an extra grid axis and set vmem_limit_bytes
    # (v7x has only 64 MiB VMEM / 32 MiB scoped default, v5e 16 MiB scoped).
    return pl.pallas_call(
        dain_kernel,
        out_shape=jax.ShapeDtypeStruct((N, NCLASS), jnp.float32),
        grid_spec=pltpu.PrefetchScalarGridSpec(
            num_scalar_prefetch=0,
            grid=(1,),
            in_specs=[
                pl.BlockSpec((N, Cin, P), lambda i: (0, 0, 0)),
                pl.BlockSpec((N, Cin, P), lambda i: (0, 0, 0)),
                pl.BlockSpec((Cin, CF), lambda i: (0, 0)),
                pl.BlockSpec((1, CF), lambda i: (0, 0)),
                pl.BlockSpec((Cin, CF), lambda i: (0, 0)),
                pl.BlockSpec((1, CF), lambda i: (0, 0)),
                pl.BlockSpec((NCLASS, 2 * CF), lambda i: (0, 0)),
                pl.BlockSpec((1, NCLASS), lambda i: (0, 0)),
            ],
            out_specs=pl.BlockSpec((N, NCLASS), lambda i: (0, 0)),
            scratch_shapes=[
                pltpu.VMEM((N, CF), jnp.float32),   # pooled img features
                pltpu.VMEM((N, CF), jnp.float32),   # pooled diff features
            ],
        ),
        compiler_params=pltpu.CompilerParams(
            dimension_semantics=("arbitrary",)),
    )(img, diff, params["w1"], b1, params["w2"], b2, params["w_fc"], bfc)


# Pure-JAX reference for validation -----------------------------------------
def dain_reference(img_nchw, diff_nchw, params):
    def feats(x, w, b):
        y = jnp.einsum("nchw,cf->nfhw", x, w) + b[None, :, None, None]
        y = jnp.clip(y, 0.0, 6.0)
        return y.mean(axis=3).mean(axis=2)

    img_f = feats(img_nchw, params["w1"], params["b1"])
    diff_f = feats(diff_nchw, params["w2"], params["b2"])
    diff_f = diff_f + img_f
    out = jnp.concatenate([img_f, diff_f], axis=1)
    return out @ params["w_fc"].T + params["b_fc"]


if __name__ == "__main__":
    # Small shapes consistent with the module (1280 feature channels -> 256,
    # ImageNet-scale spatial -> 8x8, nclass -> 10).
    N, Cin, H, W = 2, 8, 8, 8
    CF = 256          # stand-in for MobileNetV2's 1280 feature channels
    NCLASS = 10

    key = jax.random.PRNGKey(0)
    k = jax.random.split(key, 8)
    img = jax.random.normal(k[0], (N, Cin, H, W), jnp.float32)
    diff_img = jax.random.normal(k[1], (N, Cin, H, W), jnp.float32)

    params = {
        # stand-in backbone weights (1x1 pointwise conv: Cin -> CF)
        "w1": jax.random.normal(k[2], (Cin, CF), jnp.float32) * 0.1,
        "b1": jax.random.normal(k[3], (CF,), jnp.float32) * 0.1,
        "w2": jax.random.normal(k[4], (Cin, CF), jnp.float32) * 0.1,
        "b2": jax.random.normal(k[5], (CF,), jnp.float32) * 0.1,
        # nn.Linear(1280*2, nclass) -> Linear(2*CF, NCLASS), PyTorch layout
        "w_fc": jax.random.normal(k[6], (NCLASS, 2 * CF), jnp.float32) * 0.05,
        "b_fc": jax.random.normal(k[7], (NCLASS,), jnp.float32) * 0.05,
    }
    # TODO(synk): model1/model2 are external MobileNet backbones in the original
    # code; only their final pointwise-conv+ReLU6 stage is reproduced here.

    out = jax.block_until_ready(dain_forward(img, diff_img, params))
    ref = jax.block_until_ready(dain_reference(img, diff_img, params))

    assert out.shape == (N, NCLASS), out.shape
    assert jnp.allclose(out, ref, rtol=1e-4, atol=1e-4), (
        f"max err {jnp.max(jnp.abs(out - ref))}"
    )
    print("KERNEL_OK")
</pallas_src>

<mosaic_0001>
module attributes {stable_mosaic.version = 11 : i64} {
  func.func @dain_kernel(%arg0: i32, %arg1: memref<2x8x64xf32, #tpu.memory_space<vmem>>, %arg2: memref<2x8x64xf32, #tpu.memory_space<vmem>>, %arg3: memref<8x256xf32, #tpu.memory_space<vmem>>, %arg4: memref<1x256xf32, #tpu.memory_space<vmem>>, %arg5: memref<8x256xf32, #tpu.memory_space<vmem>>, %arg6: memref<1x256xf32, #tpu.memory_space<vmem>>, %arg7: memref<10x512xf32, #tpu.memory_space<vmem>>, %arg8: memref<1x10xf32, #tpu.memory_space<vmem>>, %arg9: memref<2x10xf32, #tpu.memory_space<vmem>>, %arg10: memref<2x256xf32, #tpu.memory_space<vmem>>, %arg11: memref<2x256xf32, #tpu.memory_space<vmem>>) attributes {dimension_semantics = [#tpu.dimension_semantics<arbitrary>], iteration_bounds = array<i64: 1>, scalar_prefetch = 0 : i64, scratch_operands = 2 : i64, tpu.core_type = #tpu.core_type<tc>, window_params = [{pipeline_mode = #tpu.pipeline_mode<synchronous>, transform_indices = @transform_0, window_bounds = array<i64: 2, 8, 64>}, {pipeline_mode = #tpu.pipeline_mode<synchronous>, transform_indices = @transform_1, window_bounds = array<i64: 2, 8, 64>}, {pipeline_mode = #tpu.pipeline_mode<synchronous>, transform_indices = @transform_2, window_bounds = array<i64: 8, 256>}, {pipeline_mode = #tpu.pipeline_mode<synchronous>, transform_indices = @transform_3, window_bounds = array<i64: 1, 256>}, {pipeline_mode = #tpu.pipeline_mode<synchronous>, transform_indices = @transform_4, window_bounds = array<i64: 8, 256>}, {pipeline_mode = #tpu.pipeline_mode<synchronous>, transform_indices = @transform_5, window_bounds = array<i64: 1, 256>}, {pipeline_mode = #tpu.pipeline_mode<synchronous>, transform_indices = @transform_6, window_bounds = array<i64: 10, 512>}, {pipeline_mode = #tpu.pipeline_mode<synchronous>, transform_indices = @transform_7, window_bounds = array<i64: 1, 10>}, {pipeline_mode = #tpu.pipeline_mode<synchronous>, transform_indices = @transform_8, window_bounds = array<i64: 2, 10>}]} {
    %c0 = arith.constant 0 : index
    %c0_0 = arith.constant 0 : index
    %0 = vector.load %arg3[%c0, %c0_0] : memref<8x256xf32, #tpu.memory_space<vmem>>, vector<8x256xf32>
    %c0_1 = arith.constant 0 : index
    %c0_2 = arith.constant 0 : index
    %1 = vector.load %arg4[%c0_1, %c0_2] : memref<1x256xf32, #tpu.memory_space<vmem>>, vector<1x256xf32>
    %c0_3 = arith.constant 0 : index
    %c0_4 = arith.constant 0 : index
    %2 = vector.load %arg5[%c0_3, %c0_4] : memref<8x256xf32, #tpu.memory_space<vmem>>, vector<8x256xf32>
    %c0_5 = arith.constant 0 : index
    %c0_6 = arith.constant 0 : index
    %3 = vector.load %arg6[%c0_5, %c0_6] : memref<1x256xf32, #tpu.memory_space<vmem>>, vector<1x256xf32>
    %c0_7 = arith.constant 0 : index
    %c0_8 = arith.constant 0 : index
    %c0_9 = arith.constant 0 : index
    %4 = vector.load %arg1[%c0_7, %c0_8, %c0_9] : memref<2x8x64xf32, #tpu.memory_space<vmem>>, vector<1x8x64xf32>
    %5 = vector.shape_cast %4 : vector<1x8x64xf32> to vector<8x64xf32>
    %cst = arith.constant dense<0.000000e+00> : vector<64x256xf32>
    %6 = tpu.matmul %5, %0, %cst {dimension_numbers = #tpu.dot_dimension_numbers<[0], [0], [1], [1], [0, 1, 1, 1], [], []>} : vector<8x64xf32>, vector<8x256xf32>, vector<64x256xf32> -> vector<64x256xf32>
    %7 = vector.broadcast %1 : vector<1x256xf32> to vector<64x256xf32>
    %8 = arith.addf %6, %7 : vector<64x256xf32>
    %cst_10 = arith.constant 0.000000e+00 : f32
    %cst_11 = arith.constant 6.000000e+00 : f32
    %9 = vector.broadcast %cst_10 : f32 to vector<64x256xf32>
    %10 = arith.maximumf %9, %8 : vector<64x256xf32>
    %11 = vector.broadcast %cst_11 : f32 to vector<64x256xf32>
    %12 = arith.minimumf %11, %10 : vector<64x256xf32>
    %cst_12 = arith.constant dense<0.000000e+00> : vector<256xf32>
    %13 = vector.multi_reduction <add>, %12, %cst_12 [0] : vector<64x256xf32> to vector<256xf32>
    %14 = vector.shape_cast %13 : vector<256xf32> to vector<1x256xf32>
    %cst_13 = arith.constant 6.400000e+01 : f32
    %15 = vector.broadcast %cst_13 : f32 to vector<1x256xf32>
    %16 = arith.divf %14, %15 : vector<1x256xf32>
    %c0_14 = arith.constant 0 : index
    %c0_15 = arith.constant 0 : index
    %17 = vector.load %arg10[%c0_14, %c0_15] : memref<2x256xf32, #tpu.memory_space<vmem>>, vector<1x256xf32>
    tpu.vector_store %arg10[%c0_14, %c0_15], %16 {strides = array<i32>} : memref<2x256xf32, #tpu.memory_space<vmem>>, vector<1x256xf32>,
    %c0_16 = arith.constant 0 : index
    %c0_17 = arith.constant 0 : index
    %c0_18 = arith.constant 0 : index
    %18 = vector.load %arg2[%c0_16, %c0_17, %c0_18] : memref<2x8x64xf32, #tpu.memory_space<vmem>>, vector<1x8x64xf32>
    %19 = vector.shape_cast %18 : vector<1x8x64xf32> to vector<8x64xf32>
    %cst_19 = arith.constant dense<0.000000e+00> : vector<64x256xf32>
    %20 = tpu.matmul %19, %2, %cst_19 {dimension_numbers = #tpu.dot_dimension_numbers<[0], [0], [1], [1], [0, 1, 1, 1], [], []>} : vector<8x64xf32>, vector<8x256xf32>, vector<64x256xf32> -> vector<64x256xf32>
    %21 = vector.broadcast %3 : vector<1x256xf32> to vector<64x256xf32>
    %22 = arith.addf %20, %21 : vector<64x256xf32>
    %cst_20 = arith.constant 0.000000e+00 : f32
    %cst_21 = arith.constant 6.000000e+00 : f32
    %23 = vector.broadcast %cst_20 : f32 to vector<64x256xf32>
    %24 = arith.maximumf %23, %22 : vector<64x256xf32>
    %25 = vector.broadcast %cst_21 : f32 to vector<64x256xf32>
    %26 = arith.minimumf %25, %24 : vector<64x256xf32>
    %cst_22 = arith.constant dense<0.000000e+00> : vector<256xf32>
    %27 = vector.multi_reduction <add>, %26, %cst_22 [0] : vector<64x256xf32> to vector<256xf32>
    %28 = vector.shape_cast %27 : vector<256xf32> to vector<1x256xf32>
    %cst_23 = arith.constant 6.400000e+01 : f32
    %29 = vector.broadcast %cst_23 : f32 to vector<1x256xf32>
    %30 = arith.divf %28, %29 : vector<1x256xf32>
    %c0_24 = arith.constant 0 : index
    %c0_25 = arith.constant 0 : index
    %31 = vector.load %arg11[%c0_24, %c0_25] : memref<2x256xf32, #tpu.memory_space<vmem>>, vector<1x256xf32>
    tpu.vector_store %arg11[%c0_24, %c0_25], %30 {strides = array<i32>} : memref<2x256xf32, #tpu.memory_space<vmem>>, vector<1x256xf32>,
    %c1 = arith.constant 1 : index
    %c0_26 = arith.constant 0 : index
    %c0_27 = arith.constant 0 : index
    %32 = vector.load %arg1[%c1, %c0_26, %c0_27] : memref<2x8x64xf32, #tpu.memory_space<vmem>>, vector<1x8x64xf32>
    %33 = vector.shape_cast %32 : vector<1x8x64xf32> to vector<8x64xf32>
    %cst_28 = arith.constant dense<0.000000e+00> : vector<64x256xf32>
    %34 = tpu.matmul %33, %0, %cst_28 {dimension_numbers = #tpu.dot_dimension_numbers<[0], [0], [1], [1], [0, 1, 1, 1], [], []>} : vector<8x64xf32>, vector<8x256xf32>, vector<64x256xf32> -> vector<64x256xf32>
    %35 = vector.broadcast %1 : vector<1x256xf32> to vector<64x256xf32>
    %36 = arith.addf %34, %35 : vector<64x256xf32>
    %cst_29 = arith.constant 0.000000e+00 : f32
    %cst_30 = arith.constant 6.000000e+00 : f32
    %37 = vector.broadcast %cst_29 : f32 to vector<64x256xf32>
    %38 = arith.maximumf %37, %36 : vector<64x256xf32>
    %39 = vector.broadcast %cst_30 : f32 to vector<64x256xf32>
    %40 = arith.minimumf %39, %38 : vector<64x256xf32>
    %cst_31 = arith.constant dense<0.000000e+00> : vector<256xf32>
    %41 = vector.multi_reduction <add>, %40, %cst_31 [0] : vector<64x256xf32> to vector<256xf32>
    %42 = vector.shape_cast %41 : vector<256xf32> to vector<1x256xf32>
    %cst_32 = arith.constant 6.400000e+01 : f32
    %43 = vector.broadcast %cst_32 : f32 to vector<1x256xf32>
    %44 = arith.divf %42, %43 : vector<1x256xf32>
    %c1_33 = arith.constant 1 : index
    %c0_34 = arith.constant 0 : index
    %45 = vector.load %arg10[%c1_33, %c0_34] : memref<2x256xf32, #tpu.memory_space<vmem>>, vector<1x256xf32>
    tpu.vector_store %arg10[%c1_33, %c0_34], %44 {strides = array<i32>} : memref<2x256xf32, #tpu.memory_space<vmem>>, vector<1x256xf32>,
    %c1_35 = arith.constant 1 : index
    %c0_36 = arith.constant 0 : index
    %c0_37 = arith.constant 0 : index
    %46 = vector.load %arg2[%c1_35, %c0_36, %c0_37] : memref<2x8x64xf32, #tpu.memory_space<vmem>>, vector<1x8x64xf32>
    %47 = vector.shape_cast %46 : vector<1x8x64xf32> to vector<8x64xf32>
    %cst_38 = arith.constant dense<0.000000e+00> : vector<64x256xf32>
    %48 = tpu.matmul %47, %2, %cst_38 {dimension_numbers = #tpu.dot_dimension_numbers<[0], [0], [1], [1], [0, 1, 1, 1], [], []>} : vector<8x64xf32>, vector<8x256xf32>, vector<64x256xf32> -> vector<64x256xf32>
    %49 = vector.broadcast %3 : vector<1x256xf32> to vector<64x256xf32>
    %50 = arith.addf %48, %49 : vector<64x256xf32>
    %cst_39 = arith.constant 0.000000e+00 : f32
    %cst_40 = arith.constant 6.000000e+00 : f32
    %51 = vector.broadcast %cst_39 : f32 to vector<64x256xf32>
    %52 = arith.maximumf %51, %50 : vector<64x256xf32>
    %53 = vector.broadcast %cst_40 : f32 to vector<64x256xf32>
    %54 = arith.minimumf %53, %52 : vector<64x256xf32>
    %cst_41 = arith.constant dense<0.000000e+00> : vector<256xf32>
    %55 = vector.multi_reduction <add>, %54, %cst_41 [0] : vector<64x256xf32> to vector<256xf32>
    %56 = vector.shape_cast %55 : vector<256xf32> to vector<1x256xf32>
    %cst_42 = arith.constant 6.400000e+01 : f32
    %57 = vector.broadcast %cst_42 : f32 to vector<1x256xf32>
    %58 = arith.divf %56, %57 : vector<1x256xf32>
    %c1_43 = arith.constant 1 : index
    %c0_44 = arith.constant 0 : index
    %59 = vector.load %arg11[%c1_43, %c0_44] : memref<2x256xf32, #tpu.memory_space<vmem>>, vector<1x256xf32>
    tpu.vector_store %arg11[%c1_43, %c0_44], %58 {strides = array<i32>} : memref<2x256xf32, #tpu.memory_space<vmem>>, vector<1x256xf32>,
    %c0_45 = arith.constant 0 : index
    %c0_46 = arith.constant 0 : index
    %60 = vector.load %arg10[%c0_45, %c0_46] : memref<2x256xf32, #tpu.memory_space<vmem>>, vector<2x256xf32>
    %c0_47 = arith.constant 0 : index
    %c0_48 = arith.constant 0 : index
    %61 = vector.load %arg11[%c0_47, %c0_48] : memref<2x256xf32, #tpu.memory_space<vmem>>, vector<2x256xf32>
    %62 = arith.addf %61, %60 : vector<2x256xf32>
    %c0_49 = arith.constant 0 : index
    %c0_50 = arith.constant 0 : index
    %63 = vector.load %arg7[%c0_49, %c0_50] : memref<10x512xf32, #tpu.memory_space<vmem>>, vector<10x512xf32>
    %64 = vector.extract_strided_slice %63 {offsets = [0, 0], sizes = [10, 256], strides = [1, 1]} : vector<10x512xf32> to vector<10x256xf32>
    %cst_51 = arith.constant dense<0.000000e+00> : vector<2x10xf32>
    %65 = tpu.matmul %60, %64, %cst_51 {dimension_numbers = #tpu.dot_dimension_numbers<[1], [1], [0], [0], [0, 0, 1, 0], [], []>} : vector<2x256xf32>, vector<10x256xf32>, vector<2x10xf32> -> vector<2x10xf32>
    %66 = vector.extract_strided_slice %63 {offsets = [0, 256], sizes = [10, 256], strides = [1, 1]} : vector<10x512xf32> to vector<10x256xf32>
    %cst_52 = arith.constant dense<0.000000e+00> : vector<2x10xf32>
    %67 = tpu.matmul %62, %66, %cst_52 {dimension_numbers = #tpu.dot_dimension_numbers<[1], [1], [0], [0], [0, 0, 1, 0], [], []>} : vector<2x256xf32>, vector<10x256xf32>, vector<2x10xf32> -> vector<2x10xf32>
    %68 = arith.addf %65, %67 : vector<2x10xf32>
    %c0_53 = arith.constant 0 : index
    %c0_54 = arith.constant 0 : index
    %69 = vector.load %arg8[%c0_53, %c0_54] : memref<1x10xf32, #tpu.memory_space<vmem>>, vector<1x10xf32>
    %70 = vector.broadcast %69 : vector<1x10xf32> to vector<2x10xf32>
    %71 = arith.addf %68, %70 : vector<2x10xf32>
    %c0_55 = arith.constant 0 : index
    %c0_56 = arith.constant 0 : index
    %72 = vector.load %arg9[%c0_55, %c0_56] : memref<2x10xf32, #tpu.memory_space<vmem>>, vector<2x10xf32>
    tpu.vector_store %arg9[%c0_55, %c0_56], %71 {strides = array<i32>} : memref<2x10xf32, #tpu.memory_space<vmem>>, vector<2x10xf32>,
    return
  }
  func.func @transform_0(%arg0: i32) -> (i32, i32, i32) {
    %c0_i32 = arith.constant 0 : i32
    %c0_i32_0 = arith.constant 0 : i32
    %c0_i32_1 = arith.constant 0 : i32
    %c0_i32_2 = arith.constant 0 : i32
    return %c0_i32, %c0_i32_0, %c0_i32_1 : i32, i32, i32
  }
  func.func @transform_1(%arg0: i32) -> (i32, i32, i32) {
    %c0_i32 = arith.constant 0 : i32
    %c0_i32_0 = arith.constant 0 : i32
    %c0_i32_1 = arith.constant 0 : i32
    %c0_i32_2 = arith.constant 0 : i32
    return %c0_i32, %c0_i32_0, %c0_i32_1 : i32, i32, i32
  }
  func.func @transform_2(%arg0: i32) -> (i32, i32) {
    %c0_i32 = arith.constant 0 : i32
    %c0_i32_0 = arith.constant 0 : i32
    %c0_i32_1 = arith.constant 0 : i32
    return %c0_i32, %c0_i32_0 : i32, i32
  }
  func.func @transform_3(%arg0: i32) -> (i32, i32) {
    %c0_i32 = arith.constant 0 : i32
    %c0_i32_0 = arith.constant 0 : i32
    %c0_i32_1 = arith.constant 0 : i32
    return %c0_i32, %c0_i32_0 : i32, i32
  }
  func.func @transform_4(%arg0: i32) -> (i32, i32) {
    %c0_i32 = arith.constant 0 : i32
    %c0_i32_0 = arith.constant 0 : i32
    %c0_i32_1 = arith.constant 0 : i32
    return %c0_i32, %c0_i32_0 : i32, i32
  }
  func.func @transform_5(%arg0: i32) -> (i32, i32) {
    %c0_i32 = arith.constant 0 : i32
    %c0_i32_0 = arith.constant 0 : i32
    %c0_i32_1 = arith.constant 0 : i32
    return %c0_i32, %c0_i32_0 : i32, i32
  }
  func.func @transform_6(%arg0: i32) -> (i32, i32) {
    %c0_i32 = arith.constant 0 : i32
    %c0_i32_0 = arith.constant 0 : i32
    %c0_i32_1 = arith.constant 0 : i32
    return %c0_i32, %c0_i32_0 : i32, i32
  }
  func.func @transform_7(%arg0: i32) -> (i32, i32) {
    %c0_i32 = arith.constant 0 : i32
    %c0_i32_0 = arith.constant 0 : i32
    %c0_i32_1 = arith.constant 0 : i32
    return %c0_i32, %c0_i32_0 : i32, i32
  }
  func.func @transform_8(%arg0: i32) -> (i32, i32) {
    %c0_i32 = arith.constant 0 : i32
    %c0_i32_0 = arith.constant 0 : i32
    %c0_i32_1 = arith.constant 0 : i32
    return %c0_i32, %c0_i32_0 : i32, i32
  }
}

</mosaic_0001>

<llo_original>
// kernel: tpu_custom_call.1
$region0: #{tpu_custom_call.1}
  #allocation0 [shape = 'u32[]', space=smem, size = 0x4, offset = 0x4, fixed_abs, tag = 'smem constant byte address 0x4 - core index']
  #allocation1 [shape = 'u32[144,128]{1,0:T(1,128)}', space=vmem, size = 0x12000, scoped, tag = 'internal scratch']
  #allocation2 [shape = 'f32[2,256]{1,0:T(2,128)}', space=vmem, size = 0x800, scoped, tag = 'scratch operand']
  #allocation3 [shape = 'f32[2,256]{1,0:T(2,128)}', space=vmem, size = 0x800, scoped, tag = 'scratch operand']
  %s0 = inlined_call_operand.hbm [shape: f32[2,8,64], index: 0, kind: input, shape index: {}]
  %s1 = inlined_call_operand.hbm [shape: f32[2,8,64], index: 1, kind: input, shape index: {}]
  %s2 = inlined_call_operand.hbm [shape: f32[8,256], index: 2, kind: input, shape index: {}]
  %s3 = inlined_call_operand.vmem [shape: f32[1,256], index: 3, kind: input, shape index: {}]
  %s4 = inlined_call_operand.hbm [shape: f32[8,256], index: 4, kind: input, shape index: {}]
  %s5 = inlined_call_operand.vmem [shape: f32[1,256], index: 5, kind: input, shape index: {}]
  %s6 = inlined_call_operand.hbm [shape: f32[10,512], index: 6, kind: input, shape index: {}]
  %s7 = inlined_call_operand.vmem [shape: f32[1,10], index: 7, kind: input, shape index: {}]
  %s8 = inlined_call_operand.hbm [shape: f32[2,10], index: 8, kind: output, shape index: {}]
  %s9 = sld [smem:[#allocation0]]
  $region62: #{tpu_custom_call.1} parent=0
    _
  %s11 = ssub.s32 1, %s9
  %s12 = scalar_select 0, %s11, %s9
  $region1: #{tpu_custom_call.1} parent=0
    #allocation4 [shape = 'u8[8192]{0}', space=vmem, size = 0x2000, scoped, tag = 'input window, operand 0, single buffered']
    #allocation5 [shape = 's32[1]{0}', space=sflag, size = 0x4, scoped, tag = 'scoped memory for tpu_custom_call.1']
    #allocation6 [shape = 's32[1]{0}', space=sflag, size = 0x4, scoped, tag = 'scoped memory for tpu_custom_call.1']
    #allocation7 [shape = 'u8[8192]{0}', space=vmem, size = 0x2000, scoped, tag = 'input window, operand 1, single buffered']
    #allocation8 [shape = 's32[1]{0}', space=sflag, size = 0x4, scoped, tag = 'scoped memory for tpu_custom_call.1']
    #allocation9 [shape = 'u8[8192]{0}', space=vmem, size = 0x2000, scoped, tag = 'input window, operand 2, single buffered']
    #allocation10 [shape = 'u8[8192]{0}', space=vmem, size = 0x2000, scoped, tag = 'input window, operand 4, single buffered']
    #allocation11 [shape = 's32[1]{0}', space=sflag, size = 0x4, scoped, tag = 'scoped memory for tpu_custom_call.1']
    #allocation12 [shape = 'u8[32768]{0}', space=vmem, size = 0x8000, scoped, tag = 'input window, operand 6, single buffered']
    #allocation13 [shape = 'u8[1024]{0}', space=vmem, size = 0x400, scoped, tag = 'output window, operand 0, single buffered']
    %13 = vsyncpa [#allocation5], 0
    %14 = vsyncpa [#allocation8], 0
    %15 = vsyncpa [#allocation11], 0
    %16 = vsyncpa [#allocation6], 0
    // Predicated region
    $region2: #{tpu_custom_call.1} parent=1 // pred_check
      _
    $region3: #{tpu_custom_call.1} parent=1 // pred_check_branch
      %18 = sbr.rel (0) target = $region5
    $region4: #{tpu_custom_call.1} parent=1 // pred_region
      %s20 = ssub.s32 256, 256
      %21 = vsyncadd [#allocation5], %s20
      %s22 = sshll.u32 [#allocation4], 4
      %s23 = int_to_ptr.vmem [resolvable:$true] %s22
      %28 = dma.hbm_to_vmem [thread:$0]  %s0, 256, %s23, [#allocation5], 128, 128, 8
    $region5: #{tpu_custom_call.1} parent=1 // pred_fallthru
      _
    // Predicated region
    $region6: #{tpu_custom_call.1} parent=1 // pred_check
      _
    $region7: #{tpu_custom_call.1} parent=1 // pred_check_branch
      %30 = sbr.rel (0) target = $region9
    $region8: #{tpu_custom_call.1} parent=1 // pred_region
      %s32 = ssub.s32 256, 256
      %33 = vsyncadd [#allocation8], %s32
      %s34 = sshll.u32 [#allocation7], 4
      %s35 = int_to_ptr.vmem [resolvable:$true] %s34
      %40 = dma.hbm_to_vmem [thread:$0]  %s1, 256, %s35, [#allocation8], 128, 128, 8
    $region9: #{tpu_custom_call.1} parent=1 // pred_fallthru
      _
    // Predicated region
    $region10: #{tpu_custom_call.1} parent=1 // pred_check
      _
    $region11: #{tpu_custom_call.1} parent=1 // pred_check_branch
      %42 = sbr.rel (0) target = $region13
    $region12: #{tpu_custom_call.1} parent=1 // pred_region
      %s44 = ssub.s32 256, 256
      %45 = vsyncadd [#allocation8], %s44
      %s47 = sshll.u32 [#allocation9], 4
      %s48 = int_to_ptr.vmem [resolvable:$true] %s47
      %50 = dma.hbm_to_vmem [thread:$0]  %s2, 256, %s48, [#allocation8]
    $region13: #{tpu_custom_call.1} parent=1 // pred_fallthru
      _
    // Predicated region
    $region14: #{tpu_custom_call.1} parent=1 // pred_check
      _
    $region15: #{tpu_custom_call.1} parent=1 // pred_check_branch
      %52 = sbr.rel (0) target = $region17
    $region16: #{tpu_custom_call.1} parent=1 // pred_region
      _
    $region17: #{tpu_custom_call.1} parent=1 // pred_fallthru
      _
    // Predicated region
    $region18: #{tpu_custom_call.1} parent=1 // pred_check
      _
    $region19: #{tpu_custom_call.1} parent=1 // pred_check_branch
      %54 = sbr.rel (0) target = $region21
    $region20: #{tpu_custom_call.1} parent=1 // pred_region
      %s56 = ssub.s32 256, 256
      %57 = vsyncadd [#allocation11], %s56
      %s59 = sshll.u32 [#allocation10], 4
      %s60 = int_to_ptr.vmem [resolvable:$true] %s59
      %62 = dma.hbm_to_vmem [thread:$0]  %s4, 256, %s60, [#allocation11]
    $region21: #{tpu_custom_call.1} parent=1 // pred_fallthru
      _
    // Predicated region
    $region22: #{tpu_custom_call.1} parent=1 // pred_check
      _
    $region23: #{tpu_custom_call.1} parent=1 // pred_check_branch
      %64 = sbr.rel (0) target = $region25
    $region24: #{tpu_custom_call.1} parent=1 // pred_region
      _
    $region25: #{tpu_custom_call.1} parent=1 // pred_fallthru
      _
    // Predicated region
    $region26: #{tpu_custom_call.1} parent=1 // pred_check
      _
    $region27: #{tpu_custom_call.1} parent=1 // pred_check_branch
      %66 = sbr.rel (0) target = $region29
    $region28: #{tpu_custom_call.1} parent=1 // pred_region
      %s68 = ssub.s32 1024, 1024
      %69 = vsyncadd [#allocation11], %s68
      %s70 = sshll.u32 [#allocation12], 4
      %s71 = int_to_ptr.vmem [resolvable:$true] %s70
      %76 = dma.hbm_to_vmem [thread:$0]  %s6, 1024, %s71, [#allocation11], 512, 512, 32
    $region29: #{tpu_custom_call.1} parent=1 // pred_fallthru
      _
    // Predicated region
    $region30: #{tpu_custom_call.1} parent=1 // pred_check
      _
    $region31: #{tpu_custom_call.1} parent=1 // pred_check_branch
      %78 = sbr.rel (0) target = $region33
    $region32: #{tpu_custom_call.1} parent=1 // pred_region
      _
    $region33: #{tpu_custom_call.1} parent=1 // pred_fallthru
      _
    // Predicated region
    $region34: #{tpu_custom_call.1} parent=1 // pred_check
      _
    $region35: #{tpu_custom_call.1} parent=1 // pred_check_branch
      %80 = sbr.rel (0) target = $region37
    $region36: #{tpu_custom_call.1} parent=1 // pred_region
      %81 = dma.done [#allocation5], 256
    $region37: #{tpu_custom_call.1} parent=1 // pred_fallthru
      _
    // Predicated region
    $region38: #{tpu_custom_call.1} parent=1 // pred_check
      _
    $region39: #{tpu_custom_call.1} parent=1 // pred_check_branch
      %83 = sbr.rel (0) target = $region41
    $region40: #{tpu_custom_call.1} parent=1 // pred_region
      %84 = dma.done [#allocation8], 256
    $region41: #{tpu_custom_call.1} parent=1 // pred_fallthru
      _
    // Predicated region
    $region42: #{tpu_custom_call.1} parent=1 // pred_check
      _
    $region43: #{tpu_custom_call.1} parent=1 // pred_check_branch
      %86 = sbr.rel (0) target = $region45
    $region44: #{tpu_custom_call.1} parent=1 // pred_region
      %87 = dma.done [#allocation8], 256
    $region45: #{tpu_custom_call.1} parent=1 // pred_fallthru
      _
    // Predicated region
    $region46: #{tpu_custom_call.1} parent=1 // pred_check
      _
    $region47: #{tpu_custom_call.1} parent=1 // pred_check_branch
      %89 = sbr.rel (0) target = $region49
    $region48: #{tpu_custom_call.1} parent=1 // pred_region
      %90 = dma.done [#allocation11], 256
    $region49: #{tpu_custom_call.1} parent=1 // pred_fallthru
      _
    // Predicated region
    $region50: #{tpu_custom_call.1} parent=1 // pred_check
      _
    $region51: #{tpu_custom_call.1} parent=1 // pred_check_branch
      %92 = sbr.rel (0) target = $region53
    $region52: #{tpu_custom_call.1} parent=1 // pred_region
      %93 = dma.done [#allocation11], 1024
    $region53: #{tpu_custom_call.1} parent=1 // pred_fallthru
      _
    %v94 = vld [vmem:[#allocation9] sm:$0xff]
    %v95 = vld [vmem:[#allocation9 + $0x8] sm:$0xff]
    %v96 = vld [vmem:[%s3] sm:$0x3]
    %v97 = vld [vmem:[#allocation10] sm:$0xff]
    %v98 = vld [vmem:[#allocation10 + $0x8] sm:$0xff]
    %v99 = vld [vmem:[%s5] sm:$0x3]
    %v100 = vld [vmem:[#allocation4] sm:$0xff]
    %v102 = vlaneseq
    %v103 = vshrl.u32 %v102, 7
    %v104 = vsub.s32 0, %v103
    %v105 = vrot.slane %v96, %v104
    %v106 = vlaneseq
    %v107 = vshrl.u32 %v106, 7
    %v108 = vsub.s32 1, %v107
    %v109 = vrot.slane %v96, %v108
    %112 = vxpose.xlu0.b32.start [1/16] %v100, 128
    %113 = vxpose.xlu0.b32.cont [2/16] 0.0, 128
    %114 = vxpose.xlu0.b32.cont [3/16] 0.0, 128
    %115 = vxpose.xlu0.b32.cont [4/16] 0.0, 128
    %116 = vxpose.xlu0.b32.cont [5/16] 0.0, 128
    %117 = vxpose.xlu0.b32.cont [6/16] 0.0, 128
    %118 = vxpose.xlu0.b32.cont [7/16] 0.0, 128
    %119 = vxpose.xlu0.b32.cont [8/16] 0.0, 128
    %120 = vxpose.xlu0.b32.cont [9/16] 0.0, 128
    %121 = vxpose.xlu0.b32.cont [10/16] 0.0, 128
    %122 = vxpose.xlu0.b32.cont [11/16] 0.0, 128
    %123 = vxpose.xlu0.b32.cont [12/16] 0.0, 128
    %124 = vxpose.xlu0.b32.cont [13/16] 0.0, 128
    %125 = vxpose.xlu0.b32.cont [14/16] 0.0, 128
    %126 = vxpose.xlu0.b32.cont [15/16] 0.0, 128
    %127 = vxpose.xlu0.b32.end [16/16] 0.0, 128
    %v128 = vpop.trf.xlu0
    %v129 = vpop.trf.xlu0
    %v130 = vpop.trf.xlu0
    %v131 = vpop.trf.xlu0
    %v132 = vpop.trf.xlu0
    %v133 = vpop.trf.xlu0
    %v134 = vpop.trf.xlu0
    %v135 = vpop.trf.xlu0
    %v136 = vpop.trf.xlu0
    %v137 = vpop.trf.xlu0
    %v138 = vpop.trf.xlu0
    %v139 = vpop.trf.xlu0
    %v140 = vpop.trf.xlu0
    %v141 = vpop.trf.xlu0
    %v142 = vpop.trf.xlu0
    %v143 = vpop.trf.xlu0
    %vm144 = vcmask 64512
    %v146 = vsel %vm144, %v128, 0
    %v149 = vsel %vm144, %v129, 0
    %v152 = vsel %vm144, %v130, 0
    %v155 = vsel %vm144, %v131, 0
    %v158 = vsel %vm144, %v132, 0
    %v161 = vsel %vm144, %v133, 0
    %v164 = vsel %vm144, %v134, 0
    %v167 = vsel %vm144, %v135, 0
    %169 = vmatprep.subr.mxu0 %v95
    %170 = vmatpush1.msra.mxu0 %v94
    %171 = vmatprep.subr.mxu0 0.0
    %172 = vmatpush1.msra.mxu0 0.0
    %173 = vmatprep.subr.mxu0 0.0
    %174 = vmatpush1.msra.mxu0 0.0
    %175 = vmatprep.subr.mxu0 0.0
    %176 = vmatpush1.msra.mxu0 0.0
    %177 = vmatprep.subr.mxu0 0.0
    %178 = vmatpush1.msra.mxu0 0.0
    %179 = vmatprep.subr.mxu0 0.0
    %180 = vmatpush1.msra.mxu0 0.0
    %181 = vmatprep.subr.mxu0 0.0
    %182 = vmatpush1.msra.mxu0 0.0
    %183 = vmatprep.subr.mxu0 0.0
    %184 = vmatpush1.msra.mxu0 0.0
    %185 = vmatprep.subr.mxu0 0.0
    %186 = vmatpush1.msra.mxu0 0.0
    %187 = vmatprep.subr.mxu0 0.0
    %188 = vmatpush1.msra.mxu0 0.0
    %189 = vmatprep.subr.mxu0 0.0
    %190 = vmatpush1.msra.mxu0 0.0
    %191 = vmatprep.subr.mxu0 0.0
    %192 = vmatpush1.msra.mxu0 0.0
    %193 = vmatprep.subr.mxu0 0.0
    %194 = vmatpush1.msra.mxu0 0.0
    %195 = vmatprep.subr.mxu0 0.0
    %196 = vmatpush1.msra.mxu0 0.0
    %197 = vmatprep.subr.mxu0 0.0
    %198 = vmatpush1.msra.mxu0 0.0
    %199 = vmatprep.subr.mxu0 0.0
    %200 = vmatpush1.msra.mxu0 0.0
    %201 = vmatprep.subr.mxu0 0.0
    %202 = vmatpush1.msra.mxu0 0.0
    %203 = vmatprep.subr.mxu0 0.0
    %204 = vmatpush1.msra.mxu0 0.0
    %205 = vmatprep.subr.mxu0 0.0
    %206 = vmatpush1.msra.mxu0 0.0
    %207 = vmatprep.subr.mxu0 0.0
    %208 = vmatpush1.msra.mxu0 0.0
    %209 = vmatprep.subr.mxu0 0.0
    %210 = vmatpush1.msra.mxu0 0.0
    %211 = vmatprep.subr.mxu0 0.0
    %212 = vmatpush1.msra.mxu0 0.0
    %213 = vmatprep.subr.mxu0 0.0
    %214 = vmatpush1.msra.mxu0 0.0
    %215 = vmatprep.subr.mxu0 0.0
    %216 = vmatpush1.msra.mxu0 0.0
    %217 = vmatprep.subr.mxu0 0.0
    %218 = vmatpush1.msra.mxu0 0.0
    %219 = vmatprep.subr.mxu0 0.0
    %220 = vmatpush1.msra.mxu0 0.0
    %221 = vmatprep.subr.mxu0 0.0
    %222 = vmatpush1.msra.mxu0 0.0
    %223 = vmatprep.subr.mxu0 0.0
    %224 = vmatpush1.msra.mxu0 0.0
    %225 = vmatprep.subr.mxu0 0.0
    %226 = vmatpush1.msra.mxu0 0.0
    %227 = vmatprep.subr.mxu0 0.0
    %228 = vmatpush1.msra.mxu0 0.0
    %229 = vmatprep.subr.mxu0 0.0
    %230 = vmatpush1.msra.mxu0 0.0
    %231 = vmatprep.subr.mxu0 0.0
    %232 = vmatpush1.msra.mxu0 0.0
    %233 = vmatprep.mubr.f32.mxu0 0.0
    %234 = vmatmul.mubr.f32.gmra.mrb[0].mxu0 %v146
    %v235 = vpop.f32.mrb[0].mxu0
    %v236 = vadd.f32 %v105, %v235
    %v237 = vpop.f32.mrb[0].mxu0
    %v238 = vadd.f32 %v109, %v237
    %239 = vmatprep.mubr.f32.mxu0 0.0
    %240 = vmatmul.mubr.f32.gmra.mrb[0].mxu0 %v149
    %v241 = vpop.f32.mrb[0].mxu0
    %v242 = vadd.f32 %v105, %v241
    %v243 = vpop.f32.mrb[0].mxu0
    %v244 = vadd.f32 %v109, %v243
    %245 = vmatprep.mubr.f32.mxu0 0.0
    %246 = vmatmul.mubr.f32.gmra.mrb[0].mxu0 %v152
    %v247 = vpop.f32.mrb[0].mxu0
    %v248 = vadd.f32 %v105, %v247
    %v249 = vpop.f32.mrb[0].mxu0
    %v250 = vadd.f32 %v109, %v249
    %251 = vmatprep.mubr.f32.mxu0 0.0
    %252 = vmatmul.mubr.f32.gmra.mrb[0].mxu0 %v155
    %v253 = vpop.f32.mrb[0].mxu0
    %v254 = vadd.f32 %v105, %v253
    %v255 = vpop.f32.mrb[0].mxu0
    %v256 = vadd.f32 %v109, %v255
    %257 = vmatprep.mubr.f32.mxu0 0.0
    %258 = vmatmul.mubr.f32.gmra.mrb[0].mxu0 %v158
    %v259 = vpop.f32.mrb[0].mxu0
    %v260 = vadd.f32 %v105, %v259
    %v261 = vpop.f32.mrb[0].mxu0
    %v262 = vadd.f32 %v109, %v261
    %263 = vmatprep.mubr.f32.mxu0 0.0
    %264 = vmatmul.mubr.f32.gmra.mrb[0].mxu0 %v161
    %v265 = vpop.f32.mrb[0].mxu0
    %v266 = vadd.f32 %v105, %v265
    %v267 = vpop.f32.mrb[0].mxu0
    %v268 = vadd.f32 %v109, %v267
    %269 = vmatprep.mubr.f32.mxu0 0.0
    %270 = vmatmul.mubr.f32.gmra.mrb[0].mxu0 %v164
    %v271 = vpop.f32.mrb[0].mxu0
    %v272 = vadd.f32 %v105, %v271
    %v273 = vpop.f32.mrb[0].mxu0
    %v274 = vadd.f32 %v109, %v273
    %275 = vmatprep.mubr.f32.mxu0 0.0
    %276 = vmatmul.mubr.f32.gmra.mrb[0].mxu0 %v167
    %v277 = vpop.f32.mrb[0].mxu0
    %v278 = vadd.f32 %v105, %v277
    %v279 = vpop.f32.mrb[0].mxu0
    %v280 = vadd.f32 %v109, %v279
    %281 = vdwg.mxu0
    %v282 = vmax.f32 %v236, 0.0
    %v283 = vmax.f32 %v238, 0.0
    %v284 = vmax.f32 %v242, 0.0
    %v285 = vmax.f32 %v244, 0.0
    %v286 = vmax.f32 %v248, 0.0
    %v287 = vmax.f32 %v250, 0.0
    %v288 = vmax.f32 %v254, 0.0
    %v289 = vmax.f32 %v256, 0.0
    %v290 = vmax.f32 %v260, 0.0
    %v291 = vmax.f32 %v262, 0.0
    %v292 = vmax.f32 %v266, 0.0
    %v293 = vmax.f32 %v268, 0.0
    %v294 = vmax.f32 %v272, 0.0
    %v295 = vmax.f32 %v274, 0.0
    %v296 = vmax.f32 %v278, 0.0
    %v297 = vmax.f32 %v280, 0.0
    %v298 = vmin.f32 %v282, 6.0
    %v299 = vmin.f32 %v283, 6.0
    %v300 = vmin.f32 %v284, 6.0
    %v301 = vmin.f32 %v285, 6.0
    %v302 = vmin.f32 %v286, 6.0
    %v303 = vmin.f32 %v287, 6.0
    %v304 = vmin.f32 %v288, 6.0
    %v305 = vmin.f32 %v289, 6.0
    %v306 = vmin.f32 %v290, 6.0
    %v307 = vmin.f32 %v291, 6.0
    %v308 = vmin.f32 %v292, 6.0
    %v309 = vmin.f32 %v293, 6.0
    %v310 = vmin.f32 %v294, 6.0
    %v311 = vmin.f32 %v295, 6.0
    %v312 = vmin.f32 %v296, 6.0
    %v313 = vmin.f32 %v297, 6.0
    %v314 = vadd.f32 %v298, %v300
    %v315 = vadd.f32 %v314, %v302
    %v316 = vadd.f32 %v315, %v304
    %v317 = vadd.f32 %v316, %v306
    %v318 = vadd.f32 %v317, %v308
    %v319 = vadd.f32 %v318, %v310
    %v320 = vadd.f32 %v319, %v312
    %v321 = vrot.slane %v320, 4
    %v322 = vadd.f32 %v320, %v321
    %v323 = vrot.slane %v322, 2
    %v324 = vadd.f32 %v322, %v323
    %v325 = vrot.slane %v324, 1
    %v326 = vadd.f32 %v324, %v325
    %v327 = vadd.f32 %v299, %v301
    %v328 = vadd.f32 %v327, %v303
    %v329 = vadd.f32 %v328, %v305
    %v330 = vadd.f32 %v329, %v307
    %v331 = vadd.f32 %v330, %v309
    %v332 = vadd.f32 %v331, %v311
    %v333 = vadd.f32 %v332, %v313
    %v334 = vrot.slane %v333, 4
    %v335 = vadd.f32 %v333, %v334
    %v336 = vrot.slane %v335, 2
    %v337 = vadd.f32 %v335, %v336
    %v338 = vrot.slane %v337, 1
    %v339 = vadd.f32 %v337, %v338
    %v340 = vrcp.pop 64.0
    %v341 = vmul.f32 %v326, %v340
    %v342 = vmul.f32 %v339, %v340
    %v345 = vcombine.low %v341, %v342
    %v347 = vunpack.c.l.s4 1966171168
    %v348 = vunpack.c.0.s8 %v347
    %v349 = vlaneseq
    %v350 = vshrl.u32 %v349, 7
    %v351 = vsub.s32 %v348, %v350
    %v352 = vrot.slane %v345, %v351
    %v354 = vunpack.c.l.s4 1966171168
    %v355 = vunpack.c.0.s8 %v354
    %v356 = vlaneseq
    %v357 = vshrl.u32 %v356, 7
    %v358 = vsub.s32 %v355, %v357
    %v359 = vrot.slane %v352, %v358
    %v361 = vlaneseq
    %vm362 = vcmp.ge.s32.totalorder %v361, 0
    %vm363 = vcmp.lt.s32.totalorder %v361, 256
    %vm364 = vmand %vm362, %vm363
    %365 = vst.msk [vmem:[#allocation2] ss:$2 sm:$0x3] %vm364, %v359
    %v366 = vld [vmem:[#allocation7] sm:$0xff]
    %v368 = vlaneseq
    %v369 = vshrl.u32 %v368, 7
    %v370 = vsub.s32 0, %v369
    %v371 = vrot.slane %v99, %v370
    %v372 = vlaneseq
    %v373 = vshrl.u32 %v372, 7
    %v374 = vsub.s32 1, %v373
    %v375 = vrot.slane %v99, %v374
    %378 = vxpose.xlu0.b32.start [1/16] %v366, 128
    %379 = vxpose.xlu0.b32.cont [2/16] 0.0, 128
    %380 = vxpose.xlu0.b32.cont [3/16] 0.0, 128
    %381 = vxpose.xlu0.b32.cont [4/16] 0.0, 128
    %382 = vxpose.xlu0.b32.cont [5/16] 0.0, 128
    %383 = vxpose.xlu0.b32.cont [6/16] 0.0, 128
    %384 = vxpose.xlu0.b32.cont [7/16] 0.0, 128
    %385 = vxpose.xlu0.b32.cont [8/16] 0.0, 128
    %386 = vxpose.xlu0.b32.cont [9/16] 0.0, 128
    %387 = vxpose.xlu0.b32.cont [10/16] 0.0, 128
    %388 = vxpose.xlu0.b32.cont [11/16] 0.0, 128
    %389 = vxpose.xlu0.b32.cont [12/16] 0.0, 128
    %390 = vxpose.xlu0.b32.cont [13/16] 0.0, 128
    %391 = vxpose.xlu0.b32.cont [14/16] 0.0, 128
    %392 = vxpose.xlu0.b32.cont [15/16] 0.0, 128
    %393 = vxpose.xlu0.b32.end [16/16] 0.0, 128
    %v394 = vpop.trf.xlu0
    %v395 = vpop.trf.xlu0
    %v396 = vpop.trf.xlu0
    %v397 = vpop.trf.xlu0
    %v398 = vpop.trf.xlu0
    %v399 = vpop.trf.xlu0
    %v400 = vpop.trf.xlu0
    %v401 = vpop.trf.xlu0
    %v402 = vpop.trf.xlu0
    %v403 = vpop.trf.xlu0
    %v404 = vpop.trf.xlu0
    %v405 = vpop.trf.xlu0
    %v406 = vpop.trf.xlu0
    %v407 = vpop.trf.xlu0
    %v408 = vpop.trf.xlu0
    %v409 = vpop.trf.xlu0
    %v411 = vsel %vm144, %v394, 0
    %v414 = vsel %vm144, %v395, 0
    %v417 = vsel %vm144, %v396, 0
    %v420 = vsel %vm144, %v397, 0
    %v423 = vsel %vm144, %v398, 0
    %v426 = vsel %vm144, %v399, 0
    %v429 = vsel %vm144, %v400, 0
    %v432 = vsel %vm144, %v401, 0
    %434 = vmatprep.subr.mxu0 %v98
    %435 = vmatpush1.msra.mxu0 %v97
    %436 = vmatprep.subr.mxu0 0.0
    %437 = vmatpush1.msra.mxu0 0.0
    %438 = vmatprep.subr.mxu0 0.0
    %439 = vmatpush1.msra.mxu0 0.0
    %440 = vmatprep.subr.mxu0 0.0
    %441 = vmatpush1.msra.mxu0 0.0
    %442 = vmatprep.subr.mxu0 0.0
    %443 = vmatpush1.msra.mxu0 0.0
    %444 = vmatprep.subr.mxu0 0.0
    %445 = vmatpush1.msra.mxu0 0.0
    %446 = vmatprep.subr.mxu0 0.0
    %447 = vmatpush1.msra.mxu0 0.0
    %448 = vmatprep.subr.mxu0 0.0
    %449 = vmatpush1.msra.mxu0 0.0
    %450 = vmatprep.subr.mxu0 0.0
    %451 = vmatpush1.msra.mxu0 0.0
    %452 = vmatprep.subr.mxu0 0.0
    %453 = vmatpush1.msra.mxu0 0.0
    %454 = vmatprep.subr.mxu0 0.0
    %455 = vmatpush1.msra.mxu0 0.0
    %456 = vmatprep.subr.mxu0 0.0
    %457 = vmatpush1.msra.mxu0 0.0
    %458 = vmatprep.subr.mxu0 0.0
    %459 = vmatpush1.msra.mxu0 0.0
    %460 = vmatprep.subr.mxu0 0.0
    %461 = vmatpush1.msra.mxu0 0.0
    %462 = vmatprep.subr.mxu0 0.0
    %463 = vmatpush1.msra.mxu0 0.0
    %464 = vmatprep.subr.mxu0 0.0
    %465 = vmatpush1.msra.mxu0 0.0
    %466 = vmatprep.subr.mxu0 0.0
    %467 = vmatpush1.msra.mxu0 0.0
    %468 = vmatprep.subr.mxu0 0.0
    %469 = vmatpush1.msra.mxu0 0.0
    %470 = vmatprep.subr.mxu0 0.0
    %471 = vmatpush1.msra.mxu0 0.0
    %472 = vmatprep.subr.mxu0 0.0
    %473 = vmatpush1.msra.mxu0 0.0
    %474 = vmatprep.subr.mxu0 0.0
    %475 = vmatpush1.msra.mxu0 0.0
    %476 = vmatprep.subr.mxu0 0.0
    %477 = vmatpush1.msra.mxu0 0.0
    %478 = vmatprep.subr.mxu0 0.0
    %479 = vmatpush1.msra.mxu0 0.0
    %480 = vmatprep.subr.mxu0 0.0
    %481 = vmatpush1.msra.mxu0 0.0
    %482 = vmatprep.subr.mxu0 0.0
    %483 = vmatpush1.msra.mxu0 0.0
    %484 = vmatprep.subr.mxu0 0.0
    %485 = vmatpush1.msra.mxu0 0.0
    %486 = vmatprep.subr.mxu0 0.0
    %487 = vmatpush1.msra.mxu0 0.0
    %488 = vmatprep.subr.mxu0 0.0
    %489 = vmatpush1.msra.mxu0 0.0
    %490 = vmatprep.subr.mxu0 0.0
    %491 = vmatpush1.msra.mxu0 0.0
    %492 = vmatprep.subr.mxu0 0.0
    %493 = vmatpush1.msra.mxu0 0.0
    %494 = vmatprep.subr.mxu0 0.0
    %495 = vmatpush1.msra.mxu0 0.0
    %496 = vmatprep.subr.mxu0 0.0
    %497 = vmatpush1.msra.mxu0 0.0
    %498 = vmatprep.mubr.f32.mxu0 0.0
    %499 = vmatmul.mubr.f32.gmra.mrb[0].mxu0 %v411
    %v500 = vpop.f32.mrb[0].mxu0
    %v501 = vadd.f32 %v371, %v500
    %v502 = vpop.f32.mrb[0].mxu0
    %v503 = vadd.f32 %v375, %v502
    %504 = vmatprep.mubr.f32.mxu0 0.0
    %505 = vmatmul.mubr.f32.gmra.mrb[0].mxu0 %v414
    %v506 = vpop.f32.mrb[0].mxu0
    %v507 = vadd.f32 %v371, %v506
    %v508 = vpop.f32.mrb[0].mxu0
    %v509 = vadd.f32 %v375, %v508
    %510 = vmatprep.mubr.f32.mxu0 0.0
    %511 = vmatmul.mubr.f32.gmra.mrb[0].mxu0 %v417
    %v512 = vpop.f32.mrb[0].mxu0
    %v513 = vadd.f32 %v371, %v512
    %v514 = vpop.f32.mrb[0].mxu0
    %v515 = vadd.f32 %v375, %v514
    %516 = vmatprep.mubr.f32.mxu0 0.0
    %517 = vmatmul.mubr.f32.gmra.mrb[0].mxu0 %v420
    %v518 = vpop.f32.mrb[0].mxu0
    %v519 = vadd.f32 %v371, %v518
    %v520 = vpop.f32.mrb[0].mxu0
    %v521 = vadd.f32 %v375, %v520
    %522 = vmatprep.mubr.f32.mxu0 0.0
    %523 = vmatmul.mubr.f32.gmra.mrb[0].mxu0 %v423
    %v524 = vpop.f32.mrb[0].mxu0
    %v525 = vadd.f32 %v371, %v524
    %v526 = vpop.f32.mrb[0].mxu0
    %v527 = vadd.f32 %v375, %v526
    %528 = vmatprep.mubr.f32.mxu0 0.0
    %529 = vmatmul.mubr.f32.gmra.mrb[0].mxu0 %v426
    %v530 = vpop.f32.mrb[0].mxu0
    %v531 = vadd.f32 %v371, %v530
    %v532 = vpop.f32.mrb[0].mxu0
    %v533 = vadd.f32 %v375, %v532
    %534 = vmatprep.mubr.f32.mxu0 0.0
    %535 = vmatmul.mubr.f32.gmra.mrb[0].mxu0 %v429
    %v536 = vpop.f32.mrb[0].mxu0
    %v537 = vadd.f32 %v371, %v536
    %v538 = vpop.f32.mrb[0].mxu0
    %v539 = vadd.f32 %v375, %v538
    %540 = vmatprep.mubr.f32.mxu0 0.0
    %541 = vmatmul.mubr.f32.gmra.mrb[0].mxu0 %v432
    %v542 = vpop.f32.mrb[0].mxu0
    %v543 = vadd.f32 %v371, %v542
    %v544 = vpop.f32.mrb[0].mxu0
    %v545 = vadd.f32 %v375, %v544
    %546 = vdwg.mxu0
    %v547 = vmax.f32 %v501, 0.0
    %v548 = vmax.f32 %v503, 0.0
    %v549 = vmax.f32 %v507, 0.0
    %v550 = vmax.f32 %v509, 0.0
    %v551 = vmax.f32 %v513, 0.0
    %v552 = vmax.f32 %v515, 0.0
    %v553 = vmax.f32 %v519, 0.0
    %v554 = vmax.f32 %v521, 0.0
    %v555 = vmax.f32 %v525, 0.0
    %v556 = vmax.f32 %v527, 0.0
    %v557 = vmax.f32 %v531, 0.0
    %v558 = vmax.f32 %v533, 0.0
    %v559 = vmax.f32 %v537, 0.0
    %v560 = vmax.f32 %v539, 0.0
    %v561 = vmax.f32 %v543, 0.0
    %v562 = vmax.f32 %v545, 0.0
    %v563 = vmin.f32 %v547, 6.0
    %v564 = vmin.f32 %v548, 6.0
    %v565 = vmin.f32 %v549, 6.0
    %v566 = vmin.f32 %v550, 6.0
    %v567 = vmin.f32 %v551, 6.0
    %v568 = vmin.f32 %v552, 6.0
    %v569 = vmin.f32 %v553, 6.0
    %v570 = vmin.f32 %v554, 6.0
    %v571 = vmin.f32 %v555, 6.0
    %v572 = vmin.f32 %v556, 6.0
    %v573 = vmin.f32 %v557, 6.0
    %v574 = vmin.f32 %v558, 6.0
    %v575 = vmin.f32 %v559, 6.0
    %v576 = vmin.f32 %v560, 6.0
    %v577 = vmin.f32 %v561, 6.0
    %v578 = vmin.f32 %v562, 6.0
    %v579 = vadd.f32 %v563, %v565
    %v580 = vadd.f32 %v579, %v567
    %v581 = vadd.f32 %v580, %v569
    %v582 = vadd.f32 %v581, %v571
    %v583 = vadd.f32 %v582, %v573
    %v584 = vadd.f32 %v583, %v575
    %v585 = vadd.f32 %v584, %v577
    %v586 = vrot.slane %v585, 4
    %v587 = vadd.f32 %v585, %v586
    %v588 = vrot.slane %v587, 2
    %v589 = vadd.f32 %v587, %v588
    %v590 = vrot.slane %v589, 1
    %v591 = vadd.f32 %v589, %v590
    %v592 = vadd.f32 %v564, %v566
    %v593 = vadd.f32 %v592, %v568
    %v594 = vadd.f32 %v593, %v570
    %v595 = vadd.f32 %v594, %v572
    %v596 = vadd.f32 %v595, %v574
    %v597 = vadd.f32 %v596, %v576
    %v598 = vadd.f32 %v597, %v578
    %v599 = vrot.slane %v598, 4
    %v600 = vadd.f32 %v598, %v599
    %v601 = vrot.slane %v600, 2
    %v602 = vadd.f32 %v600, %v601
    %v603 = vrot.slane %v602, 1
    %v604 = vadd.f32 %v602, %v603
    %v605 = vmul.f32 %v591, %v340
    %v606 = vmul.f32 %v604, %v340
    %v609 = vcombine.low %v605, %v606
    %v611 = vunpack.c.l.s4 1966171168
    %v612 = vunpack.c.0.s8 %v611
    %v613 = vlaneseq
    %v614 = vshrl.u32 %v613, 7
    %v615 = vsub.s32 %v612, %v614
    %v616 = vrot.slane %v609, %v615
    %v618 = vunpack.c.l.s4 1966171168
    %v619 = vunpack.c.0.s8 %v618
    %v620 = vlaneseq
    %v621 = vshrl.u32 %v620, 7
    %v622 = vsub.s32 %v619, %v621
    %v623 = vrot.slane %v616, %v622
    %625 = vst.msk [vmem:[#allocation3] ss:$2 sm:$0x3] %vm364, %v623
    %s626 = scalar_lea.vmem [#allocation4], 8
    %v627 = vld [vmem:[%s626] sm:$0xff]
    %628 = vxpose.xlu0.b32.start [1/16] %v627, 128
    %629 = vxpose.xlu0.b32.cont [2/16] 0.0, 128
    %630 = vxpose.xlu0.b32.cont [3/16] 0.0, 128
    %631 = vxpose.xlu0.b32.cont [4/16] 0.0, 128
    %632 = vxpose.xlu0.b32.cont [5/16] 0.0, 128
    %633 = vxpose.xlu0.b32.cont [6/16] 0.0, 128
    %634 = vxpose.xlu0.b32.cont [7/16] 0.0, 128
    %635 = vxpose.xlu0.b32.cont [8/16] 0.0, 128
    %636 = vxpose.xlu0.b32.cont [9/16] 0.0, 128
    %637 = vxpose.xlu0.b32.cont [10/16] 0.0, 128
    %638 = vxpose.xlu0.b32.cont [11/16] 0.0, 128
    %639 = vxpose.xlu0.b32.cont [12/16] 0.0, 128
    %640 = vxpose.xlu0.b32.cont [13/16] 0.0, 128
    %641 = vxpose.xlu0.b32.cont [14/16] 0.0, 128
    %642 = vxpose.xlu0.b32.cont [15/16] 0.0, 128
    %643 = vxpose.xlu0.b32.end [16/16] 0.0, 128
    %v644 = vpop.trf.xlu0
    %v645 = vpop.trf.xlu0
    %v646 = vpop.trf.xlu0
    %v647 = vpop.trf.xlu0
    %v648 = vpop.trf.xlu0
    %v649 = vpop.trf.xlu0
    %v650 = vpop.trf.xlu0
    %v651 = vpop.trf.xlu0
    %v652 = vpop.trf.xlu0
    %v653 = vpop.trf.xlu0
    %v654 = vpop.trf.xlu0
    %v655 = vpop.trf.xlu0
    %v656 = vpop.trf.xlu0
    %v657 = vpop.trf.xlu0
    %v658 = vpop.trf.xlu0
    %v659 = vpop.trf.xlu0
    %v661 = vsel %vm144, %v644, 0
    %v664 = vsel %vm144, %v645, 0
    %v667 = vsel %vm144, %v646, 0
    %v670 = vsel %vm144, %v647, 0
    %v673 = vsel %vm144, %v648, 0
    %v676 = vsel %vm144, %v649, 0
    %v679 = vsel %vm144, %v650, 0
    %v682 = vsel %vm144, %v651, 0
    %684 = vmatprep.subr.mxu0 %v95
    %685 = vmatpush1.msra.mxu0 %v94
    %686 = vmatprep.subr.mxu0 0.0
    %687 = vmatpush1.msra.mxu0 0.0
    %688 = vmatprep.subr.mxu0 0.0
    %689 = vmatpush1.msra.mxu0 0.0
    %690 = vmatprep.subr.mxu0 0.0
    %691 = vmatpush1.msra.mxu0 0.0
    %692 = vmatprep.subr.mxu0 0.0
    %693 = vmatpush1.msra.mxu0 0.0
    %694 = vmatprep.subr.mxu0 0.0
    %695 = vmatpush1.msra.mxu0 0.0
    %696 = vmatprep.subr.mxu0 0.0
    %697 = vmatpush1.msra.mxu0 0.0
    %698 = vmatprep.subr.mxu0 0.0
    %699 = vmatpush1.msra.mxu0 0.0
    %700 = vmatprep.subr.mxu0 0.0
    %701 = vmatpush1.msra.mxu0 0.0
    %702 = vmatprep.subr.mxu0 0.0
    %703 = vmatpush1.msra.mxu0 0.0
    %704 = vmatprep.subr.mxu0 0.0
    %705 = vmatpush1.msra.mxu0 0.0
    %706 = vmatprep.subr.mxu0 0.0
    %707 = vmatpush1.msra.mxu0 0.0
    %708 = vmatprep.subr.mxu0 0.0
    %709 = vmatpush1.msra.mxu0 0.0
    %710 = vmatprep.subr.mxu0 0.0
    %711 = vmatpush1.msra.mxu0 0.0
    %712 = vmatprep.subr.mxu0 0.0
    %713 = vmatpush1.msra.mxu0 0.0
    %714 = vmatprep.subr.mxu0 0.0
    %715 = vmatpush1.msra.mxu0 0.0
    %716 = vmatprep.subr.mxu0 0.0
    %717 = vmatpush1.msra.mxu0 0.0
    %718 = vmatprep.subr.mxu0 0.0
    %719 = vmatpush1.msra.mxu0 0.0
    %720 = vmatprep.subr.mxu0 0.0
    %721 = vmatpush1.msra.mxu0 0.0
    %722 = vmatprep.subr.mxu0 0.0
    %723 = vmatpush1.msra.mxu0 0.0
    %724 = vmatprep.subr.mxu0 0.0
    %725 = vmatpush1.msra.mxu0 0.0
    %726 = vmatprep.subr.mxu0 0.0
    %727 = vmatpush1.msra.mxu0 0.0
    %728 = vmatprep.subr.mxu0 0.0
    %729 = vmatpush1.msra.mxu0 0.0
    %730 = vmatprep.subr.mxu0 0.0
    %731 = vmatpush1.msra.mxu0 0.0
    %732 = vmatprep.subr.mxu0 0.0
    %733 = vmatpush1.msra.mxu0 0.0
    %734 = vmatprep.subr.mxu0 0.0
    %735 = vmatpush1.msra.mxu0 0.0
    %736 = vmatprep.subr.mxu0 0.0
    %737 = vmatpush1.msra.mxu0 0.0
    %738 = vmatprep.subr.mxu0 0.0
    %739 = vmatpush1.msra.mxu0 0.0
    %740 = vmatprep.subr.mxu0 0.0
    %741 = vmatpush1.msra.mxu0 0.0
    %742 = vmatprep.subr.mxu0 0.0
    %743 = vmatpush1.msra.mxu0 0.0
    %744 = vmatprep.subr.mxu0 0.0
    %745 = vmatpush1.msra.mxu0 0.0
    %746 = vmatprep.subr.mxu0 0.0
    %747 = vmatpush1.msra.mxu0 0.0
    %748 = vmatprep.mubr.f32.mxu0 0.0
    %749 = vmatmul.mubr.f32.gmra.mrb[0].mxu0 %v661
    %v750 = vpop.f32.mrb[0].mxu0
    %v751 = vadd.f32 %v105, %v750
    %v752 = vpop.f32.mrb[0].mxu0
    %v753 = vadd.f32 %v109, %v752
    %754 = vmatprep.mubr.f32.mxu0 0.0
    %755 = vmatmul.mubr.f32.gmra.mrb[0].mxu0 %v664
    %v756 = vpop.f32.mrb[0].mxu0
    %v757 = vadd.f32 %v105, %v756
    %v758 = vpop.f32.mrb[0].mxu0
    %v759 = vadd.f32 %v109, %v758
    %760 = vmatprep.mubr.f32.mxu0 0.0
    %761 = vmatmul.mubr.f32.gmra.mrb[0].mxu0 %v667
    %v762 = vpop.f32.mrb[0].mxu0
    %v763 = vadd.f32 %v105, %v762
    %v764 = vpop.f32.mrb[0].mxu0
    %v765 = vadd.f32 %v109, %v764
    %766 = vmatprep.mubr.f32.mxu0 0.0
    %767 = vmatmul.mubr.f32.gmra.mrb[0].mxu0 %v670
    %v768 = vpop.f32.mrb[0].mxu0
    %v769 = vadd.f32 %v105, %v768
    %v770 = vpop.f32.mrb[0].mxu0
    %v771 = vadd.f32 %v109, %v770
    %772 = vmatprep.mubr.f32.mxu0 0.0
    %773 = vmatmul.mubr.f32.gmra.mrb[0].mxu0 %v673
    %v774 = vpop.f32.mrb[0].mxu0
    %v775 = vadd.f32 %v105, %v774
    %v776 = vpop.f32.mrb[0].mxu0
    %v777 = vadd.f32 %v109, %v776
    %778 = vmatprep.mubr.f32.mxu0 0.0
    %779 = vmatmul.mubr.f32.gmra.mrb[0].mxu0 %v676
    %v780 = vpop.f32.mrb[0].mxu0
    %v781 = vadd.f32 %v105, %v780
    %v782 = vpop.f32.mrb[0].mxu0
    %v783 = vadd.f32 %v109, %v782
    %784 = vmatprep.mubr.f32.mxu0 0.0
    %785 = vmatmul.mubr.f32.gmra.mrb[0].mxu0 %v679
    %v786 = vpop.f32.mrb[0].mxu0
    %v787 = vadd.f32 %v105, %v786
    %v788 = vpop.f32.mrb[0].mxu0
    %v789 = vadd.f32 %v109, %v788
    %790 = vmatprep.mubr.f32.mxu0 0.0
    %791 = vmatmul.mubr.f32.gmra.mrb[0].mxu0 %v682
    %v792 = vpop.f32.mrb[0].mxu0
    %v793 = vadd.f32 %v105, %v792
    %v794 = vpop.f32.mrb[0].mxu0
    %v795 = vadd.f32 %v109, %v794
    %796 = vdwg.mxu0
    %v797 = vmax.f32 %v751, 0.0
    %v798 = vmax.f32 %v753, 0.0
    %v799 = vmax.f32 %v757, 0.0
    %v800 = vmax.f32 %v759, 0.0
    %v801 = vmax.f32 %v763, 0.0
    %v802 = vmax.f32 %v765, 0.0
    %v803 = vmax.f32 %v769, 0.0
    %v804 = vmax.f32 %v771, 0.0
    %v805 = vmax.f32 %v775, 0.0
    %v806 = vmax.f32 %v777, 0.0
    %v807 = vmax.f32 %v781, 0.0
    %v808 = vmax.f32 %v783, 0.0
    %v809 = vmax.f32 %v787, 0.0
    %v810 = vmax.f32 %v789, 0.0
    %v811 = vmax.f32 %v793, 0.0
    %v812 = vmax.f32 %v795, 0.0
    %v813 = vmin.f32 %v797, 6.0
    %v814 = vmin.f32 %v798, 6.0
    %v815 = vmin.f32 %v799, 6.0
    %v816 = vmin.f32 %v800, 6.0
    %v817 = vmin.f32 %v801, 6.0
    %v818 = vmin.f32 %v802, 6.0
    %v819 = vmin.f32 %v803, 6.0
    %v820 = vmin.f32 %v804, 6.0
    %v821 = vmin.f32 %v805, 6.0
    %v822 = vmin.f32 %v806, 6.0
    %v823 = vmin.f32 %v807, 6.0
    %v824 = vmin.f32 %v808, 6.0
    %v825 = vmin.f32 %v809, 6.0
    %v826 = vmin.f32 %v810, 6.0
    %v827 = vmin.f32 %v811, 6.0
    %v828 = vmin.f32 %v812, 6.0
    %v829 = vadd.f32 %v813, %v815
    %v830 = vadd.f32 %v829, %v817
    %v831 = vadd.f32 %v830, %v819
    %v832 = vadd.f32 %v831, %v821
    %v833 = vadd.f32 %v832, %v823
    %v834 = vadd.f32 %v833, %v825
    %v835 = vadd.f32 %v834, %v827
    %v836 = vrot.slane %v835, 4
    %v837 = vadd.f32 %v835, %v836
    %v838 = vrot.slane %v837, 2
    %v839 = vadd.f32 %v837, %v838
    %v840 = vrot.slane %v839, 1
    %v841 = vadd.f32 %v839, %v840
    %v842 = vadd.f32 %v814, %v816
    %v843 = vadd.f32 %v842, %v818
    %v844 = vadd.f32 %v843, %v820
    %v845 = vadd.f32 %v844, %v822
    %v846 = vadd.f32 %v845, %v824
    %v847 = vadd.f32 %v846, %v826
    %v848 = vadd.f32 %v847, %v828
    %v849 = vrot.slane %v848, 4
    %v850 = vadd.f32 %v848, %v849
    %v851 = vrot.slane %v850, 2
    %v852 = vadd.f32 %v850, %v851
    %v853 = vrot.slane %v852, 1
    %v854 = vadd.f32 %v852, %v853
    %v855 = vmul.f32 %v841, %v340
    %v856 = vmul.f32 %v854, %v340
    %v859 = vcombine.low %v855, %v856
    %v861 = vunpack.c.l.s4 1966171168
    %v862 = vunpack.c.0.s8 %v861
    %v863 = vlaneseq
    %v864 = vshrl.u32 %v863, 7
    %v865 = vsub.s32 %v862, %v864
    %v866 = vrot.slane %v859, %v865
    %v868 = vunpack.c.l.s4 1966171168
    %v869 = vunpack.c.0.s8 %v868
    %v870 = vlaneseq
    %v871 = vshrl.u32 %v870, 7
    %v872 = vsub.s32 %v869, %v871
    %v873 = vrot.slane %v866, %v872
    %s875 = scalar_lea.vmem [#allocation2], 1
    %876 = vst.msk [vmem:[%s875] ss:$2 sm:$0x3] %vm364, %v873
    %s877 = scalar_lea.vmem [#allocation7], 8
    %v878 = vld [vmem:[%s877] sm:$0xff]
    %879 = vxpose.xlu0.b32.start [1/16] %v878, 128
    %880 = vxpose.xlu0.b32.cont [2/16] 0.0, 128
    %881 = vxpose.xlu0.b32.cont [3/16] 0.0, 128
    %882 = vxpose.xlu0.b32.cont [4/16] 0.0, 128
    %883 = vxpose.xlu0.b32.cont [5/16] 0.0, 128
    %884 = vxpose.xlu0.b32.cont [6/16] 0.0, 128
    %885 = vxpose.xlu0.b32.cont [7/16] 0.0, 128
    %886 = vxpose.xlu0.b32.cont [8/16] 0.0, 128
    %887 = vxpose.xlu0.b32.cont [9/16] 0.0, 128
    %888 = vxpose.xlu0.b32.cont [10/16] 0.0, 128
    %889 = vxpose.xlu0.b32.cont [11/16] 0.0, 128
    %890 = vxpose.xlu0.b32.cont [12/16] 0.0, 128
    %891 = vxpose.xlu0.b32.cont [13/16] 0.0, 128
    %892 = vxpose.xlu0.b32.cont [14/16] 0.0, 128
    %893 = vxpose.xlu0.b32.cont [15/16] 0.0, 128
    %894 = vxpose.xlu0.b32.end [16/16] 0.0, 128
    %v895 = vpop.trf.xlu0
    %v896 = vpop.trf.xlu0
    %v897 = vpop.trf.xlu0
    %v898 = vpop.trf.xlu0
    %v899 = vpop.trf.xlu0
    %v900 = vpop.trf.xlu0
    %v901 = vpop.trf.xlu0
    %v902 = vpop.trf.xlu0
    %v903 = vpop.trf.xlu0
    %v904 = vpop.trf.xlu0
    %v905 = vpop.trf.xlu0
    %v906 = vpop.trf.xlu0
    %v907 = vpop.trf.xlu0
    %v908 = vpop.trf.xlu0
    %v909 = vpop.trf.xlu0
    %v910 = vpop.trf.xlu0
    %v912 = vsel %vm144, %v895, 0
    %v915 = vsel %vm144, %v896, 0
    %v918 = vsel %vm144, %v897, 0
    %v921 = vsel %vm144, %v898, 0
    %v924 = vsel %vm144, %v899, 0
    %v927 = vsel %vm144, %v900, 0
    %v930 = vsel %vm144, %v901, 0
    %v933 = vsel %vm144, %v902, 0
    %935 = vmatprep.subr.mxu0 %v98
    %936 = vmatpush1.msra.mxu0 %v97
    %937 = vmatprep.subr.mxu0 0.0
    %938 = vmatpush1.msra.mxu0 0.0
    %939 = vmatprep.subr.mxu0 0.0
    %940 = vmatpush1.msra.mxu0 0.0
    %941 = vmatprep.subr.mxu0 0.0
    %942 = vmatpush1.msra.mxu0 0.0
    %943 = vmatprep.subr.mxu0 0.0
    %944 = vmatpush1.msra.mxu0 0.0
    %945 = vmatprep.subr.mxu0 0.0
    %946 = vmatpush1.msra.mxu0 0.0
    %947 = vmatprep.subr.mxu0 0.0
    %948 = vmatpush1.msra.mxu0 0.0
    %949 = vmatprep.subr.mxu0 0.0
    %950 = vmatpush1.msra.mxu0 0.0
    %951 = vmatprep.subr.mxu0 0.0
    %952 = vmatpush1.msra.mxu0 0.0
    %953 = vmatprep.subr.mxu0 0.0
    %954 = vmatpush1.msra.mxu0 0.0
    %955 = vmatprep.subr.mxu0 0.0
    %956 = vmatpush1.msra.mxu0 0.0
    %957 = vmatprep.subr.mxu0 0.0
    %958 = vmatpush1.msra.mxu0 0.0
    %959 = vmatprep.subr.mxu0 0.0
    %960 = vmatpush1.msra.mxu0 0.0
    %961 = vmatprep.subr.mxu0 0.0
    %962 = vmatpush1.msra.mxu0 0.0
    %963 = vmatprep.subr.mxu0 0.0
    %964 = vmatpush1.msra.mxu0 0.0
    %965 = vmatprep.subr.mxu0 0.0
    %966 = vmatpush1.msra.mxu0 0.0
    %967 = vmatprep.subr.mxu0 0.0
    %968 = vmatpush1.msra.mxu0 0.0
    %969 = vmatprep.subr.mxu0 0.0
    %970 = vmatpush1.msra.mxu0 0.0
    %971 = vmatprep.subr.mxu0 0.0
    %972 = vmatpush1.msra.mxu0 0.0
    %973 = vmatprep.subr.mxu0 0.0
    %974 = vmatpush1.msra.mxu0 0.0
    %975 = vmatprep.subr.mxu0 0.0
    %976 = vmatpush1.msra.mxu0 0.0
    %977 = vmatprep.subr.mxu0 0.0
    %978 = vmatpush1.msra.mxu0 0.0
    %979 = vmatprep.subr.mxu0 0.0
    %980 = vmatpush1.msra.mxu0 0.0
    %981 = vmatprep.subr.mxu0 0.0
    %982 = vmatpush1.msra.mxu0 0.0
    %983 = vmatprep.subr.mxu0 0.0
    %984 = vmatpush1.msra.mxu0 0.0
    %985 = vmatprep.subr.mxu0 0.0
    %986 = vmatpush1.msra.mxu0 0.0
    %987 = vmatprep.subr.mxu0 0.0
    %988 = vmatpush1.msra.mxu0 0.0
    %989 = vmatprep.subr.mxu0 0.0
    %990 = vmatpush1.msra.mxu0 0.0
    %991 = vmatprep.subr.mxu0 0.0
    %992 = vmatpush1.msra.mxu0 0.0
    %993 = vmatprep.subr.mxu0 0.0
    %994 = vmatpush1.msra.mxu0 0.0
    %995 = vmatprep.subr.mxu0 0.0
    %996 = vmatpush1.msra.mxu0 0.0
    %997 = vmatprep.subr.mxu0 0.0
    %998 = vmatpush1.msra.mxu0 0.0
    %999 = vmatprep.mubr.f32.mxu0 0.0
    %1000 = vmatmul.mubr.f32.gmra.mrb[0].mxu0 %v912
    %v1001 = vpop.f32.mrb[0].mxu0
    %v1002 = vadd.f32 %v371, %v1001
    %v1003 = vpop.f32.mrb[0].mxu0
    %v1004 = vadd.f32 %v375, %v1003
    %1005 = vmatprep.mubr.f32.mxu0 0.0
    %1006 = vmatmul.mubr.f32.gmra.mrb[0].mxu0 %v915
    %v1007 = vpop.f32.mrb[0].mxu0
    %v1008 = vadd.f32 %v371, %v1007
    %v1009 = vpop.f32.mrb[0].mxu0
    %v1010 = vadd.f32 %v375, %v1009
    %1011 = vmatprep.mubr.f32.mxu0 0.0
    %1012 = vmatmul.mubr.f32.gmra.mrb[0].mxu0 %v918
    %v1013 = vpop.f32.mrb[0].mxu0
    %v1014 = vadd.f32 %v371, %v1013
    %v1015 = vpop.f32.mrb[0].mxu0
    %v1016 = vadd.f32 %v375, %v1015
    %1017 = vmatprep.mubr.f32.mxu0 0.0
    %1018 = vmatmul.mubr.f32.gmra.mrb[0].mxu0 %v921
    %v1019 = vpop.f32.mrb[0].mxu0
    %v1020 = vadd.f32 %v371, %v1019
    %v1021 = vpop.f32.mrb[0].mxu0
    %v1022 = vadd.f32 %v375, %v1021
    %1023 = vmatprep.mubr.f32.mxu0 0.0
    %1024 = vmatmul.mubr.f32.gmra.mrb[0].mxu0 %v924
    %v1025 = vpop.f32.mrb[0].mxu0
    %v1026 = vadd.f32 %v371, %v1025
    %v1027 = vpop.f32.mrb[0].mxu0
    %v1028 = vadd.f32 %v375, %v1027
    %1029 = vmatprep.mubr.f32.mxu0 0.0
    %1030 = vmatmul.mubr.f32.gmra.mrb[0].mxu0 %v927
    %v1031 = vpop.f32.mrb[0].mxu0
    %v1032 = vadd.f32 %v371, %v1031
    %v1033 = vpop.f32.mrb[0].mxu0
    %v1034 = vadd.f32 %v375, %v1033
    %1035 = vmatprep.mubr.f32.mxu0 0.0
    %1036 = vmatmul.mubr.f32.gmra.mrb[0].mxu0 %v930
    %v1037 = vpop.f32.mrb[0].mxu0
    %v1038 = vadd.f32 %v371, %v1037
    %v1039 = vpop.f32.mrb[0].mxu0
    %v1040 = vadd.f32 %v375, %v1039
    %1041 = vmatprep.mubr.f32.mxu0 0.0
    %1042 = vmatmul.mubr.f32.gmra.mrb[0].mxu0 %v933
    %v1043 = vpop.f32.mrb[0].mxu0
    %v1044 = vadd.f32 %v371, %v1043
    %v1045 = vpop.f32.mrb[0].mxu0
    %v1046 = vadd.f32 %v375, %v1045
    %1047 = vdwg.mxu0
    %v1048 = vmax.f32 %v1002, 0.0
    %v1049 = vmax.f32 %v1004, 0.0
    %v1050 = vmax.f32 %v1008, 0.0
    %v1051 = vmax.f32 %v1010, 0.0
    %v1052 = vmax.f32 %v1014, 0.0
    %v1053 = vmax.f32 %v1016, 0.0
    %v1054 = vmax.f32 %v1020, 0.0
    %v1055 = vmax.f32 %v1022, 0.0
    %v1056 = vmax.f32 %v1026, 0.0
    %v1057 = vmax.f32 %v1028, 0.0
    %v1058 = vmax.f32 %v1032, 0.0
    %v1059 = vmax.f32 %v1034, 0.0
    %v1060 = vmax.f32 %v1038, 0.0
    %v1061 = vmax.f32 %v1040, 0.0
    %v1062 = vmax.f32 %v1044, 0.0
    %v1063 = vmax.f32 %v1046, 0.0
    %v1064 = vmin.f32 %v1048, 6.0
    %v1065 = vmin.f32 %v1049, 6.0
    %v1066 = vmin.f32 %v1050, 6.0
    %v1067 = vmin.f32 %v1051, 6.0
    %v1068 = vmin.f32 %v1052, 6.0
    %v1069 = vmin.f32 %v1053, 6.0
    %v1070 = vmin.f32 %v1054, 6.0
    %v1071 = vmin.f32 %v1055, 6.0
    %v1072 = vmin.f32 %v1056, 6.0
    %v1073 = vmin.f32 %v1057, 6.0
    %v1074 = vmin.f32 %v1058, 6.0
    %v1075 = vmin.f32 %v1059, 6.0
    %v1076 = vmin.f32 %v1060, 6.0
    %v1077 = vmin.f32 %v1061, 6.0
    %v1078 = vmin.f32 %v1062, 6.0
    %v1079 = vmin.f32 %v1063, 6.0
    %v1080 = vadd.f32 %v1064, %v1066
    %v1081 = vadd.f32 %v1080, %v1068
    %v1082 = vadd.f32 %v1081, %v1070
    %v1083 = vadd.f32 %v1082, %v1072
    %v1084 = vadd.f32 %v1083, %v1074
    %v1085 = vadd.f32 %v1084, %v1076
    %v1086 = vadd.f32 %v1085, %v1078
    %v1087 = vrot.slane %v1086, 4
    %v1088 = vadd.f32 %v1086, %v1087
    %v1089 = vrot.slane %v1088, 2
    %v1090 = vadd.f32 %v1088, %v1089
    %v1091 = vrot.slane %v1090, 1
    %v1092 = vadd.f32 %v1090, %v1091
    %v1093 = vadd.f32 %v1065, %v1067
    %v1094 = vadd.f32 %v1093, %v1069
    %v1095 = vadd.f32 %v1094, %v1071
    %v1096 = vadd.f32 %v1095, %v1073
    %v1097 = vadd.f32 %v1096, %v1075
    %v1098 = vadd.f32 %v1097, %v1077
    %v1099 = vadd.f32 %v1098, %v1079
    %v1100 = vrot.slane %v1099, 4
    %v1101 = vadd.f32 %v1099, %v1100
    %v1102 = vrot.slane %v1101, 2
    %v1103 = vadd.f32 %v1101, %v1102
    %v1104 = vrot.slane %v1103, 1
    %v1105 = vadd.f32 %v1103, %v1104
    %v1106 = vmul.f32 %v1092, %v340
    %v1107 = vmul.f32 %v1105, %v340
    %v1110 = vcombine.low %v1106, %v1107
    %v1112 = vunpack.c.l.s4 1966171168
    %v1113 = vunpack.c.0.s8 %v1112
    %v1114 = vlaneseq
    %v1115 = vshrl.u32 %v1114, 7
    %v1116 = vsub.s32 %v1113, %v1115
    %v1117 = vrot.slane %v1110, %v1116
    %v1119 = vunpack.c.l.s4 1966171168
    %v1120 = vunpack.c.0.s8 %v1119
    %v1121 = vlaneseq
    %v1122 = vshrl.u32 %v1121, 7
    %v1123 = vsub.s32 %v1120, %v1122
    %v1124 = vrot.slane %v1117, %v1123
    %s1126 = scalar_lea.vmem [#allocation3], 1
    %1127 = vst.msk [vmem:[%s1126] ss:$2 sm:$0x3] %vm364, %v1124
    %v1128 = vld [vmem:[#allocation2] sm:$0xf]
    %v1129 = vld [vmem:[#allocation3] sm:$0xf]
    %v1130 = vadd.f32 %v1129, %v1128
    %v1131 = vld [vmem:[#allocation12] sm:$0xff]
    %v1132 = vld [vmem:[#allocation12 + $0x8] sm:$0xff]
    %v1133 = vld [vmem:[#allocation12 + $0x10] sm:$0xff]
    %v1134 = vld [vmem:[#allocation12 + $0x18] sm:$0xff]
    %v1135 = vld [vmem:[#allocation12 + $0x20] sm:$0x3]
    %v1136 = vld [vmem:[#allocation12 + $0x28] sm:$0x3]
    %v1137 = vld [vmem:[#allocation12 + $0x30] sm:$0x3]
    %v1138 = vld [vmem:[#allocation12 + $0x38] sm:$0x3]
    %v1141 = vunpack.c.l.s4 1983009808
    %v1142 = vunpack.c.0.s8 %v1141
    %v1143 = vlaneseq
    %v1144 = vshrl.u32 %v1143, 7
    %v1145 = vsub.s32 %v1142, %v1144
    %v1146 = vrot.slane %v1130, %v1145
    %v1147 = vcombine.high %v1146, %v1146
    %1150 = vmatprep.subr.mxu0 %v1134
    %1151 = vmatpush1.xpose.msra.mxu0 %v1133
    %1152 = vmatprep.subr.mxu0 %v1138
    %1153 = vmatpush1.xpose.msra.mxu0 %v1137
    %1154 = vmatprep.subr.mxu0 0.0
    %1155 = vmatpush1.xpose.msra.mxu0 0.0
    %1156 = vmatprep.subr.mxu0 0.0
    %1157 = vmatpush1.xpose.msra.mxu0 0.0
    %1158 = vmatprep.subr.mxu0 0.0
    %1159 = vmatpush1.xpose.msra.mxu0 0.0
    %1160 = vmatprep.subr.mxu0 0.0
    %1161 = vmatpush1.xpose.msra.mxu0 0.0
    %1162 = vmatprep.subr.mxu0 0.0
    %1163 = vmatpush1.xpose.msra.mxu0 0.0
    %1164 = vmatprep.subr.mxu0 0.0
    %1165 = vmatpush1.xpose.msra.mxu0 0.0
    %1166 = vmatprep.subr.mxu0 0.0
    %1167 = vmatpush1.xpose.msra.mxu0 0.0
    %1168 = vmatprep.subr.mxu0 0.0
    %1169 = vmatpush1.xpose.msra.mxu0 0.0
    %1170 = vmatprep.subr.mxu0 0.0
    %1171 = vmatpush1.xpose.msra.mxu0 0.0
    %1172 = vmatprep.subr.mxu0 0.0
    %1173 = vmatpush1.xpose.msra.mxu0 0.0
    %1174 = vmatprep.subr.mxu0 0.0
    %1175 = vmatpush1.xpose.msra.mxu0 0.0
    %1176 = vmatprep.subr.mxu0 0.0
    %1177 = vmatpush1.xpose.msra.mxu0 0.0
    %1178 = vmatprep.subr.mxu0 0.0
    %1179 = vmatpush1.xpose.msra.mxu0 0.0
    %1180 = vmatprep.subr.mxu0 0.0
    %1181 = vmatpush1.xpose.msra.mxu0 0.0
    %1182 = vmatprep.subr.mxu0 0.0
    %1183 = vmatpush1.xpose.msra.mxu0 0.0
    %1184 = vmatprep.subr.mxu0 0.0
    %1185 = vmatpush1.xpose.msra.mxu0 0.0
    %1186 = vmatprep.subr.mxu0 0.0
    %1187 = vmatpush1.xpose.msra.mxu0 0.0
    %1188 = vmatprep.subr.mxu0 0.0
    %1189 = vmatpush1.xpose.msra.mxu0 0.0
    %1190 = vmatprep.subr.mxu0 0.0
    %1191 = vmatpush1.xpose.msra.mxu0 0.0
    %1192 = vmatprep.subr.mxu0 0.0
    %1193 = vmatpush1.xpose.msra.mxu0 0.0
    %1194 = vmatprep.subr.mxu0 0.0
    %1195 = vmatpush1.xpose.msra.mxu0 0.0
    %1196 = vmatprep.subr.mxu0 0.0
    %1197 = vmatpush1.xpose.msra.mxu0 0.0
    %1198 = vmatprep.subr.mxu0 0.0
    %1199 = vmatpush1.xpose.msra.mxu0 0.0
    %1200 = vmatprep.subr.mxu0 0.0
    %1201 = vmatpush1.xpose.msra.mxu0 0.0
    %1202 = vmatprep.subr.mxu0 0.0
    %1203 = vmatpush1.xpose.msra.mxu0 0.0
    %1204 = vmatprep.subr.mxu0 0.0
    %1205 = vmatpush1.xpose.msra.mxu0 0.0
    %1206 = vmatprep.subr.mxu0 0.0
    %1207 = vmatpush1.xpose.msra.mxu0 0.0
    %1208 = vmatprep.subr.mxu0 0.0
    %1209 = vmatpush1.xpose.msra.mxu0 0.0
    %1210 = vmatprep.subr.mxu0 0.0
    %1211 = vmatpush1.xpose.msra.mxu0 0.0
    %1212 = vmatprep.subr.mxu0 0.0
    %1213 = vmatpush1.xpose.msra.mxu0 0.0
    %1214 = vmatprep.mubr.f32.mxu0 %v1147
    %1215 = vmatmul.mubr.f32.gmra.mrb[0].mxu0 %v1146
    %v1216 = vpop.f32.mrb[0].mxu0
    %v1217 = vadd.f32 0.0, %v1216
    %v1218 = vpop.f32.mrb[0].mxu0
    %1219 = vdwg.mxu0
    %v1222 = vunpack.c.l.s4 1983009808
    %v1223 = vunpack.c.0.s8 %v1222
    %v1224 = vlaneseq
    %v1225 = vshrl.u32 %v1224, 7
    %v1226 = vsub.s32 %v1223, %v1225
    %v1227 = vrot.slane %v1128, %v1226
    %v1228 = vcombine.high %v1227, %v1227
    %1231 = vmatprep.subr.mxu0 %v1132
    %1232 = vmatpush1.xpose.msra.mxu0 %v1131
    %1233 = vmatprep.subr.mxu0 %v1136
    %1234 = vmatpush1.xpose.msra.mxu0 %v1135
    %1235 = vmatprep.subr.mxu0 0.0
    %1236 = vmatpush1.xpose.msra.mxu0 0.0
    %1237 = vmatprep.subr.mxu0 0.0
    %1238 = vmatpush1.xpose.msra.mxu0 0.0
    %1239 = vmatprep.subr.mxu0 0.0
    %1240 = vmatpush1.xpose.msra.mxu0 0.0
    %1241 = vmatprep.subr.mxu0 0.0
    %1242 = vmatpush1.xpose.msra.mxu0 0.0
    %1243 = vmatprep.subr.mxu0 0.0
    %1244 = vmatpush1.xpose.msra.mxu0 0.0
    %1245 = vmatprep.subr.mxu0 0.0
    %1246 = vmatpush1.xpose.msra.mxu0 0.0
    %1247 = vmatprep.subr.mxu0 0.0
    %1248 = vmatpush1.xpose.msra.mxu0 0.0
    %1249 = vmatprep.subr.mxu0 0.0
    %1250 = vmatpush1.xpose.msra.mxu0 0.0
    %1251 = vmatprep.subr.mxu0 0.0
    %1252 = vmatpush1.xpose.msra.mxu0 0.0
    %1253 = vmatprep.subr.mxu0 0.0
    %1254 = vmatpush1.xpose.msra.mxu0 0.0
    %1255 = vmatprep.subr.mxu0 0.0
    %1256 = vmatpush1.xpose.msra.mxu0 0.0
    %1257 = vmatprep.subr.mxu0 0.0
    %1258 = vmatpush1.xpose.msra.mxu0 0.0
    %1259 = vmatprep.subr.mxu0 0.0
    %1260 = vmatpush1.xpose.msra.mxu0 0.0
    %1261 = vmatprep.subr.mxu0 0.0
    %1262 = vmatpush1.xpose.msra.mxu0 0.0
    %1263 = vmatprep.subr.mxu0 0.0
    %1264 = vmatpush1.xpose.msra.mxu0 0.0
    %1265 = vmatprep.subr.mxu0 0.0
    %1266 = vmatpush1.xpose.msra.mxu0 0.0
    %1267 = vmatprep.subr.mxu0 0.0
    %1268 = vmatpush1.xpose.msra.mxu0 0.0
    %1269 = vmatprep.subr.mxu0 0.0
    %1270 = vmatpush1.xpose.msra.mxu0 0.0
    %1271 = vmatprep.subr.mxu0 0.0
    %1272 = vmatpush1.xpose.msra.mxu0 0.0
    %1273 = vmatprep.subr.mxu0 0.0
    %1274 = vmatpush1.xpose.msra.mxu0 0.0
    %1275 = vmatprep.subr.mxu0 0.0
    %1276 = vmatpush1.xpose.msra.mxu0 0.0
    %1277 = vmatprep.subr.mxu0 0.0
    %1278 = vmatpush1.xpose.msra.mxu0 0.0
    %1279 = vmatprep.subr.mxu0 0.0
    %1280 = vmatpush1.xpose.msra.mxu0 0.0
    %1281 = vmatprep.subr.mxu0 0.0
    %1282 = vmatpush1.xpose.msra.mxu0 0.0
    %1283 = vmatprep.subr.mxu0 0.0
    %1284 = vmatpush1.xpose.msra.mxu0 0.0
    %1285 = vmatprep.subr.mxu0 0.0
    %1286 = vmatpush1.xpose.msra.mxu0 0.0
    %1287 = vmatprep.subr.mxu0 0.0
    %1288 = vmatpush1.xpose.msra.mxu0 0.0
    %1289 = vmatprep.subr.mxu0 0.0
    %1290 = vmatpush1.xpose.msra.mxu0 0.0
    %1291 = vmatprep.subr.mxu0 0.0
    %1292 = vmatpush1.xpose.msra.mxu0 0.0
    %1293 = vmatprep.subr.mxu0 0.0
    %1294 = vmatpush1.xpose.msra.mxu0 0.0
    %1295 = vmatprep.mubr.f32.mxu0 %v1228
    %1296 = vmatmul.mubr.f32.gmra.mrb[0].mxu0 %v1227
    %v1297 = vpop.f32.mrb[0].mxu0
    %v1298 = vadd.f32 %v1217, %v1297
    %v1299 = vpop.f32.mrb[0].mxu0
    %1300 = vdwg.mxu0
    %v1301 = vld [vmem:[%s7] sm:$0x1]
    %v1303 = vlaneseq
    %v1304 = vshrl.u32 %v1303, 7
    %v1305 = vsub.s32 0, %v1304
    %v1306 = vrot.slane %v1301, %v1305
    %v1308 = vadd.f32 %v1298, %v1306
    %vm1309 = vcmask 74752
    %1310 = vst.msk [vmem:[#allocation13] sm:$0x3] %vm1309, %v1308
    // Predicated region
    $region54: #{tpu_custom_call.1} parent=1 // pred_check
      _
    $region55: #{tpu_custom_call.1} parent=1 // pred_check_branch
      %1312 = sbr.rel (0) target = $region57
    $region56: #{tpu_custom_call.1} parent=1 // pred_region
      %s1314 = ssub.s32 32, 32
      %1315 = vsyncadd [#allocation6], %s1314
      %s1317 = sshll.u32 [#allocation13], 4
      %s1318 = int_to_ptr.vmem [resolvable:$true] %s1317
      %1320 = dma.vmem_to_hbm [thread:$0]  %s1318, 32, %s8, [#allocation6]
    $region57: #{tpu_custom_call.1} parent=1 // pred_fallthru
      _
    // Predicated region
    $region58: #{tpu_custom_call.1} parent=1 // pred_check
      _
    $region59: #{tpu_custom_call.1} parent=1 // pred_check_branch
      %1322 = sbr.rel (0) target = $region61
    $region60: #{tpu_custom_call.1} parent=1 // pred_region
      %1323 = dma.done [#allocation6], 32
    $region61: #{tpu_custom_call.1} parent=1 // pred_fallthru
      _
    %1324 = vsyncpa [#allocation5], 1
    %1325 = vsyncpa [#allocation8], 1
    %1326 = vsyncpa [#allocation11], 1
    %1327 = vsyncpa [#allocation6], 1

</llo_original>
